<compile_context>
chip_gen: v7x
topology: tpu7x:2x2x1
jax: 0.10.0
libtpu: 0.0.40
codegen_flags: <defaults>
</compile_context>

<pallas_src>
import functools

import jax
import jax.numpy as jnp
from jax.experimental import pallas as pl
from jax.experimental.pallas import tpu as pltpu


def _round_up(x, m):
    return (x + m - 1) // m * m


def _pick_samples_per_tile(batch, seq_len, target_rows):
    """Largest whole-sample row tile <= target_rows with rows % 8 == 0, prefer >=2 tiles."""
    divs = [d for d in range(1, batch + 1) if batch % d == 0]
    aligned = [d for d in divs if (d * seq_len) % 8 == 0]
    if not aligned:                       # fall back: single full-array block (always legal)
        return batch
    fit = [d for d in aligned if d * seq_len <= target_rows]
    if not fit:
        return min(aligned)               # smallest aligned tile (may exceed target)
    multi = [d for d in fit if batch // d >= 2]   # prefer >=2 grid steps (v7x: 2 TCs)
    return max(multi) if multi else max(fit)


def encoder_kernel(x_ref, wfc_ref, bfc_ref, wa_ref, wg_ref, ba_ref, bg_ref, o_ref, *,
                   n_layers, kernel_size, seq_len):
    """fc -> n_layers x (im2col conv1d + GLU + residual*sqrt(.5)) on one row block."""
    R = x_ref.shape[0]                     # rows in this block = samples_per_tile * seq_len
    K = kernel_size
    pad = (K - 1) // 2
    mm_dtype = wfc_ref.dtype               # MXU operand dtype (bf16 or f32); accum is f32
    scale = jnp.float32(0.5 ** 0.5)

    # fc: Linear(protein_dim -> hid_dim), batch folded into M = R rows.
    h = jnp.dot(x_ref[...], wfc_ref[...],
                preferred_element_type=jnp.float32) + bfc_ref[...]          # [R, Hp] f32

    # Hoisted once, reused by every layer: per-tap validity masks.  Row r is sequence
    # position (r % seq_len); tap shift s = k - pad reads pos + s, valid iff it stays
    # inside the same sample (reproduces Conv1d's zero "same" padding and prevents
    # cross-sample bleed; block boundaries are also sample boundaries by construction).
    pos = jax.lax.broadcasted_iota(jnp.int32, (R, 1), 0) % seq_len
    tap_masks = {}
    for k in range(K):
        s = k - pad
        if s != 0:
            tap_masks[k] = jnp.logical_and(pos + s >= 0, pos + s < seq_len)  # [R, 1] bool

    for layer in range(n_layers):
        # dropout -> identity (eval mode)
        # im2col: K sublane-rolled copies of h along lanes -> one [R, K*Hp] operand.
        # Roll/select stay f32; each column is cast to mm_dtype before the lane concat.
        cols = []
        for k in range(K):
            s = k - pad
            if s == 0:
                cols.append(h.astype(mm_dtype))
            else:
                rolled = pltpu.roll(h, shift=(-s) % R, axis=0)   # rolled[r] = h[r + s]
                cols.append(jnp.where(tap_masks[k], rolled, 0.0).astype(mm_dtype))
        x_cat = jnp.concatenate(cols, axis=1)                               # [R, K*Hp]

        # GLU halves from two lane-aligned matmuls (weights pre-split in the wrapper).
        a = jnp.dot(x_cat, wa_ref[layer],
                    preferred_element_type=jnp.float32) + ba_ref[layer]     # [R, Hp]
        g = jnp.dot(x_cat, wg_ref[layer],
                    preferred_element_type=jnp.float32) + bg_ref[layer]     # [R, Hp]

        # GLU + residual + scale, all f32 on VPU/EUP.
        h = (a * jax.nn.sigmoid(g) + h) * scale

    o_ref[...] = h.astype(o_ref.dtype)


def encoder_forward(protein, w_fc, b_fc, w_conv, b_conv, *, n_layers, kernel_size,
                    matmul_dtype=jnp.bfloat16, out_dtype=jnp.float32,
                    samples_per_tile=None, target_rows_per_tile=2048,
                    vmem_limit_bytes=48 * 1024 * 1024):
    """protein: [B, L, P] f32.  Returns [B, L, H] (out_dtype, default f32).

    w_fc: [P, H] (torch fc.weight.T), b_fc: [1, H]
    w_conv: [n_layers, K, H, 2H]  (torch Conv1d weight [2H, H, K] permuted to (2,1,0))
    b_conv: [n_layers, 2H]
    matmul_dtype: MXU operand dtype (bf16 recommended on every chip); accum stays f32.
    samples_per_tile: samples per row block (auto-picked if None; must divide B).
    """
    assert kernel_size % 2 == 1, "kernel_size must be odd"
    B, L, P = protein.shape
    H = w_fc.shape[1]
    assert w_conv.shape == (n_layers, kernel_size, H, 2 * H), "conv weight layout mismatch"

    # Lane-align the feature dims: H, P -> multiples of 128.
    H_pad = _round_up(H, 128)
    P_pad = _round_up(P, 128)

    # Row tiling: whole samples per block so masks/rolls never cross samples.
    if samples_per_tile is None:
        samples_per_tile = _pick_samples_per_tile(B, L, target_rows_per_tile)
    assert B % samples_per_tile == 0, "samples_per_tile must divide the batch"
    tile_r = samples_per_tile * L
    rows = B * L
    n_tiles = rows // tile_r
    assert tile_r % 8 == 0 or tile_r == rows, "row tile must be a multiple of 8"

    # fc weights/bias, zero-padded (padded columns/rows are zero -> padded h columns = 0).
    w_fc_p = jnp.pad(w_fc, ((0, P_pad - P), (0, H_pad - H))).astype(matmul_dtype)
    b_fc_p = jnp.pad(b_fc, ((0, 0), (0, H_pad - H))).astype(jnp.float32)

    # Conv weights: split GLU halves, zero-pad both channel dims, im2col-reshape so row
    # block k of the [K*Hp, Hp] weight is w_conv[:, k].  Padded gate columns are zero, so
    # sigmoid(0) * 0 keeps the padded output columns exactly zero through every layer.
    wa = jnp.pad(w_conv[..., :H], ((0, 0), (0, 0), (0, H_pad - H), (0, H_pad - H)))
    wg = jnp.pad(w_conv[..., H:], ((0, 0), (0, 0), (0, H_pad - H), (0, H_pad - H)))
    w_a = wa.reshape(n_layers, kernel_size * H_pad, H_pad).astype(matmul_dtype)
    w_g = wg.reshape(n_layers, kernel_size * H_pad, H_pad).astype(matmul_dtype)
    b_a = jnp.pad(b_conv[:, :H], ((0, 0), (0, H_pad - H))).reshape(n_layers, 1, H_pad)
    b_g = jnp.pad(b_conv[:, H:], ((0, 0), (0, H_pad - H))).reshape(n_layers, 1, H_pad)
    b_a = b_a.astype(jnp.float32)
    b_g = b_g.astype(jnp.float32)

    # Fold batch into rows; pad the lane dim; cast MXU operand dtype (halves input bytes
    # in bf16 -- the kernel sits near the HBM roofline at TransformerCPI sizes).
    x2d = jnp.pad(protein.reshape(rows, P), ((0, 0), (0, P_pad - P))).astype(matmul_dtype)

    kern = functools.partial(encoder_kernel, n_layers=n_layers,
                             kernel_size=kernel_size, seq_len=L)

    def full(shape):
        # Constant block index -> DMA'd once, not re-fetched across row-tile steps.
        return pl.BlockSpec(shape, lambda i, _n=len(shape): (0,) * _n)

    out2d = pl.pallas_call(
        kern,
        out_shape=jax.ShapeDtypeStruct((rows, H_pad), out_dtype),
        grid=(n_tiles,),
        in_specs=[
            pl.BlockSpec((tile_r, P_pad), lambda i: (i, 0)),       # protein row block
            full((P_pad, H_pad)),                                  # fc weight
            full((1, H_pad)),                                      # fc bias
            full((n_layers, kernel_size * H_pad, H_pad)),          # conv W (GLU 'a' half)
            full((n_layers, kernel_size * H_pad, H_pad)),          # conv W (gate half)
            full((n_layers, 1, H_pad)),                            # conv b (a)
            full((n_layers, 1, H_pad)),                            # conv b (gate)
        ],
        out_specs=pl.BlockSpec((tile_r, H_pad), lambda i: (i, 0)),
        compiler_params=pltpu.CompilerParams(
            dimension_semantics=("parallel",),        # whole samples per block -> independent
            vmem_limit_bytes=vmem_limit_bytes),
    )(x2d, w_fc_p, b_fc_p, w_a, w_g, b_a, b_g)

    return out2d[:, :H].reshape(B, L, H)


def encoder_reference(protein, w_fc, b_fc, w_conv, b_conv, *, n_layers, kernel_size):
    """Pure-JAX reference mirroring the PyTorch forward (eval mode), all f32."""
    pad = (kernel_size - 1) // 2
    H = w_fc.shape[1]
    scale = jnp.float32(0.5 ** 0.5)
    h = protein @ w_fc + b_fc  # [B, L, H]
    for i in range(n_layers):
        hp = jnp.pad(h, ((0, 0), (pad, pad), (0, 0)))
        out = sum(hp[:, k:k + h.shape[1], :] @ w_conv[i, k] for k in range(kernel_size))
        out = out + b_conv[i]
        h = (out[..., :H] * jax.nn.sigmoid(out[..., H:]) + h) * scale
    return h


if __name__ == "__main__":
    # Small, forward-consistent shapes (TransformerCPI-like: P=100, H=64).
    B, L = 4, 16            # batch, protein sequence length
    protein_dim = 100       # not lane-aligned on purpose (padded to 128 in the wrapper)
    hid_dim = 64            # not lane-aligned on purpose (padded to 128 in the wrapper)
    n_layers = 3
    kernel_size = 3         # must be odd

    key = jax.random.PRNGKey(0)
    k_x, k_wfc, k_bfc, k_wc, k_bc = jax.random.split(key, 5)

    protein = jax.random.normal(k_x, (B, L, protein_dim), dtype=jnp.float32)
    # fc: Linear(protein_dim, hid_dim); stored as [P, H] (i.e. torch weight.T)
    w_fc = 0.1 * jax.random.normal(k_wfc, (protein_dim, hid_dim), dtype=jnp.float32)
    b_fc = 0.1 * jax.random.normal(k_bfc, (1, hid_dim), dtype=jnp.float32)
    # Conv1d(hid_dim, 2*hid_dim, K): torch weight [2H, H, K] -> here [n_layers, K, H, 2H]
    w_conv = 0.1 * jax.random.normal(
        k_wc, (n_layers, kernel_size, hid_dim, 2 * hid_dim), dtype=jnp.float32)
    b_conv = 0.1 * jax.random.normal(k_bc, (n_layers, 2 * hid_dim), dtype=jnp.float32)

    ref = encoder_reference(protein, w_fc, b_fc, w_conv, b_conv,
                            n_layers=n_layers, kernel_size=kernel_size)

    # 1) f32 MXU operands, auto row tiling (2 whole-sample blocks -> pipelined grid).
    out_f32 = jax.block_until_ready(
        encoder_forward(protein, w_fc, b_fc, w_conv, b_conv,
                        n_layers=n_layers, kernel_size=kernel_size,
                        matmul_dtype=jnp.float32))
    assert out_f32.shape == (B, L, hid_dim)
    assert jnp.allclose(out_f32, ref, atol=2e-2, rtol=2e-2)

    # 2) Default path: bf16 MXU operands (all chips), f32 accum / elementwise, f32 out.
    out_bf16 = jax.block_until_ready(
        encoder_forward(protein, w_fc, b_fc, w_conv, b_conv,
                        n_layers=n_layers, kernel_size=kernel_size))
    assert jnp.allclose(out_bf16, ref, atol=8e-2, rtol=8e-2)

    # 3) Explicit finer row tiling (1 sample per block -> 4 pipelined grid steps).
    out_tiled = jax.block_until_ready(
        encoder_forward(protein, w_fc, b_fc, w_conv, b_conv,
                        n_layers=n_layers, kernel_size=kernel_size,
                        matmul_dtype=jnp.float32, samples_per_tile=1))
    assert jnp.allclose(out_tiled, ref, atol=2e-2, rtol=2e-2)

    print("KERNEL_OK")
</pallas_src>

<mosaic_0001>
module attributes {stable_mosaic.version = 11 : i64} {
  func.func @encoder_kernel(%arg0: i32, %arg1: memref<32x128xf32, #tpu.memory_space<vmem>>, %arg2: memref<128x128xf32, #tpu.memory_space<vmem>>, %arg3: memref<1x128xf32, #tpu.memory_space<vmem>>, %arg4: memref<3x384x128xf32, #tpu.memory_space<vmem>>, %arg5: memref<3x384x128xf32, #tpu.memory_space<vmem>>, %arg6: memref<3x1x128xf32, #tpu.memory_space<vmem>>, %arg7: memref<3x1x128xf32, #tpu.memory_space<vmem>>, %arg8: memref<32x128xf32, #tpu.memory_space<vmem>>) attributes {dimension_semantics = [#tpu.dimension_semantics<parallel>], iteration_bounds = array<i64: 2>, scalar_prefetch = 0 : i64, scratch_operands = 0 : i64, tpu.core_type = #tpu.core_type<tc>, window_params = [{transform_indices = @transform_0, window_bounds = array<i64: 32, 128>}, {pipeline_mode = #tpu.pipeline_mode<synchronous>, transform_indices = @transform_1, window_bounds = array<i64: 128, 128>}, {pipeline_mode = #tpu.pipeline_mode<synchronous>, transform_indices = @transform_2, window_bounds = array<i64: 1, 128>}, {pipeline_mode = #tpu.pipeline_mode<synchronous>, transform_indices = @transform_3, window_bounds = array<i64: 3, 384, 128>}, {pipeline_mode = #tpu.pipeline_mode<synchronous>, transform_indices = @transform_4, window_bounds = array<i64: 3, 384, 128>}, {pipeline_mode = #tpu.pipeline_mode<synchronous>, transform_indices = @transform_5, window_bounds = array<i64: 3, 1, 128>}, {pipeline_mode = #tpu.pipeline_mode<synchronous>, transform_indices = @transform_6, window_bounds = array<i64: 3, 1, 128>}, {transform_indices = @transform_7, window_bounds = array<i64: 32, 128>}]} {
    %c0 = arith.constant 0 : index
    %c0_0 = arith.constant 0 : index
    %0 = vector.load %arg1[%c0, %c0_0] : memref<32x128xf32, #tpu.memory_space<vmem>>, vector<32x128xf32>
    %c0_1 = arith.constant 0 : index
    %c0_2 = arith.constant 0 : index
    %1 = vector.load %arg2[%c0_1, %c0_2] : memref<128x128xf32, #tpu.memory_space<vmem>>, vector<128x128xf32>
    %cst = arith.constant dense<0.000000e+00> : vector<32x128xf32>
    %2 = tpu.matmul %0, %1, %cst {dimension_numbers = #tpu.dot_dimension_numbers<[1], [0], [0], [1], [0, 0, 1, 1], [], []>} : vector<32x128xf32>, vector<128x128xf32>, vector<32x128xf32> -> vector<32x128xf32>
    %c0_3 = arith.constant 0 : index
    %c0_4 = arith.constant 0 : index
    %3 = vector.load %arg3[%c0_3, %c0_4] : memref<1x128xf32, #tpu.memory_space<vmem>>, vector<1x128xf32>
    %4 = vector.broadcast %3 : vector<1x128xf32> to vector<32x128xf32>
    %5 = arith.addf %2, %4 : vector<32x128xf32>
    %6 = tpu.iota {dimensions = array<i32: 0>} : vector<32x1xi32>
    %c16_i32 = arith.constant 16 : i32
    %c0_i32 = arith.constant 0 : i32
    %7 = arith.cmpi eq, %c16_i32, %c0_i32 : i32
    %c1_i32 = arith.constant 1 : i32
    %8 = arith.select %7, %c1_i32, %c16_i32 : i32
    %9 = vector.broadcast %8 : i32 to vector<32x1xi32>
    %10 = arith.remsi %6, %9 : vector<32x1xi32>
    %c0_i32_5 = arith.constant 0 : i32
    %11 = vector.broadcast %c0_i32_5 : i32 to vector<32x1xi32>
    %12 = arith.cmpi ne, %10, %11 : vector<32x1xi32>
    %c0_i32_6 = arith.constant 0 : i32
    %13 = vector.broadcast %c0_i32_6 : i32 to vector<32x1xi32>
    %14 = arith.cmpi slt, %10, %13 : vector<32x1xi32>
    %c0_i32_7 = arith.constant 0 : i32
    %15 = arith.cmpi slt, %8, %c0_i32_7 : i32
    %16 = vector.broadcast %15 : i1 to vector<32x1xi1>
    %17 = vector.broadcast %16 : vector<32x1xi1> to vector<32x1xi1>
    %18 = arith.xori %14, %17 : vector<32x1xi1>
    %19 = arith.andi %18, %12 : vector<32x1xi1>
    %20 = vector.broadcast %8 : i32 to vector<32x1xi32>
    %21 = arith.addi %10, %20 : vector<32x1xi32>
    %22 = arith.select %19, %21, %10 : vector<32x1xi1>, vector<32x1xi32>
    %c-1_i32 = arith.constant -1 : i32
    %23 = vector.broadcast %c-1_i32 : i32 to vector<32x1xi32>
    %24 = arith.addi %22, %23 : vector<32x1xi32>
    %c0_i32_8 = arith.constant 0 : i32
    %25 = vector.broadcast %c0_i32_8 : i32 to vector<32x1xi32>
    %26 = arith.cmpi sge, %24, %25 : vector<32x1xi32>
    %c-1_i32_9 = arith.constant -1 : i32
    %27 = vector.broadcast %c-1_i32_9 : i32 to vector<32x1xi32>
    %28 = arith.addi %22, %27 : vector<32x1xi32>
    %c16_i32_10 = arith.constant 16 : i32
    %29 = vector.broadcast %c16_i32_10 : i32 to vector<32x1xi32>
    %30 = arith.cmpi slt, %28, %29 : vector<32x1xi32>
    %31 = arith.andi %26, %30 : vector<32x1xi1>
    %c1_i32_11 = arith.constant 1 : i32
    %32 = vector.broadcast %c1_i32_11 : i32 to vector<32x1xi32>
    %33 = arith.addi %22, %32 : vector<32x1xi32>
    %c0_i32_12 = arith.constant 0 : i32
    %34 = vector.broadcast %c0_i32_12 : i32 to vector<32x1xi32>
    %35 = arith.cmpi sge, %33, %34 : vector<32x1xi32>
    %c1_i32_13 = arith.constant 1 : i32
    %36 = vector.broadcast %c1_i32_13 : i32 to vector<32x1xi32>
    %37 = arith.addi %22, %36 : vector<32x1xi32>
    %c16_i32_14 = arith.constant 16 : i32
    %38 = vector.broadcast %c16_i32_14 : i32 to vector<32x1xi32>
    %39 = arith.cmpi slt, %37, %38 : vector<32x1xi32>
    %40 = arith.andi %35, %39 : vector<32x1xi1>
    %c1_i32_15 = arith.constant 1 : i32
    %41 = tpu.dynamic_rotate %5 by %c1_i32_15 dim 0 : vector<32x128xf32>, i32 -> vector<32x128xf32>
    %cst_16 = arith.constant 0.000000e+00 : f32
    %42 = vector.shape_cast %31 : vector<32x1xi1> to vector<32x1xi1>
    %43 = vector.broadcast %42 : vector<32x1xi1> to vector<32x128xi1>
    %44 = vector.broadcast %cst_16 : f32 to vector<32x128xf32>
    %45 = arith.select %43, %41, %44 : vector<32x128xi1>, vector<32x128xf32>
    %c31_i32 = arith.constant 31 : i32
    %46 = tpu.dynamic_rotate %5 by %c31_i32 dim 0 : vector<32x128xf32>, i32 -> vector<32x128xf32>
    %cst_17 = arith.constant 0.000000e+00 : f32
    %47 = vector.shape_cast %40 : vector<32x1xi1> to vector<32x1xi1>
    %48 = vector.broadcast %47 : vector<32x1xi1> to vector<32x128xi1>
    %49 = vector.broadcast %cst_17 : f32 to vector<32x128xf32>
    %50 = arith.select %48, %46, %49 : vector<32x128xi1>, vector<32x128xf32>
    %51 = tpu.concatenate %45, %5, %50 in 1 : vector<32x128xf32>, vector<32x128xf32>, vector<32x128xf32> -> vector<32x384xf32>
    %c0_18 = arith.constant 0 : index
    %c0_19 = arith.constant 0 : index
    %c0_20 = arith.constant 0 : index
    %52 = vector.load %arg4[%c0_18, %c0_19, %c0_20] : memref<3x384x128xf32, #tpu.memory_space<vmem>>, vector<1x384x128xf32>
    %53 = vector.shape_cast %52 : vector<1x384x128xf32> to vector<384x128xf32>
    %cst_21 = arith.constant dense<0.000000e+00> : vector<32x128xf32>
    %54 = tpu.matmul %51, %53, %cst_21 {dimension_numbers = #tpu.dot_dimension_numbers<[1], [0], [0], [1], [0, 0, 1, 1], [], []>} : vector<32x384xf32>, vector<384x128xf32>, vector<32x128xf32> -> vector<32x128xf32>
    %c0_22 = arith.constant 0 : index
    %c0_23 = arith.constant 0 : index
    %c0_24 = arith.constant 0 : index
    %55 = vector.load %arg6[%c0_22, %c0_23, %c0_24] : memref<3x1x128xf32, #tpu.memory_space<vmem>>, vector<1x1x128xf32>
    %56 = vector.shape_cast %55 : vector<1x1x128xf32> to vector<1x128xf32>
    %57 = vector.broadcast %56 : vector<1x128xf32> to vector<32x128xf32>
    %58 = arith.addf %54, %57 : vector<32x128xf32>
    %c0_25 = arith.constant 0 : index
    %c0_26 = arith.constant 0 : index
    %c0_27 = arith.constant 0 : index
    %59 = vector.load %arg5[%c0_25, %c0_26, %c0_27] : memref<3x384x128xf32, #tpu.memory_space<vmem>>, vector<1x384x128xf32>
    %60 = vector.shape_cast %59 : vector<1x384x128xf32> to vector<384x128xf32>
    %cst_28 = arith.constant dense<0.000000e+00> : vector<32x128xf32>
    %61 = tpu.matmul %51, %60, %cst_28 {dimension_numbers = #tpu.dot_dimension_numbers<[1], [0], [0], [1], [0, 0, 1, 1], [], []>} : vector<32x384xf32>, vector<384x128xf32>, vector<32x128xf32> -> vector<32x128xf32>
    %c0_29 = arith.constant 0 : index
    %c0_30 = arith.constant 0 : index
    %c0_31 = arith.constant 0 : index
    %62 = vector.load %arg7[%c0_29, %c0_30, %c0_31] : memref<3x1x128xf32, #tpu.memory_space<vmem>>, vector<1x1x128xf32>
    %63 = vector.shape_cast %62 : vector<1x1x128xf32> to vector<1x128xf32>
    %64 = vector.broadcast %63 : vector<1x128xf32> to vector<32x128xf32>
    %65 = arith.addf %61, %64 : vector<32x128xf32>
    %66 = arith.negf %65 : vector<32x128xf32>
    %67 = math.exp %66 : vector<32x128xf32>
    %cst_32 = arith.constant 1.000000e+00 : f32
    %68 = vector.broadcast %cst_32 : f32 to vector<32x128xf32>
    %69 = arith.addf %68, %67 : vector<32x128xf32>
    %70 = arith.divf %68, %69 : vector<32x128xf32>
    %71 = arith.mulf %58, %70 : vector<32x128xf32>
    %72 = arith.addf %71, %5 : vector<32x128xf32>
    %cst_33 = arith.constant 0.707106769 : f32
    %73 = vector.broadcast %cst_33 : f32 to vector<32x128xf32>
    %74 = arith.mulf %72, %73 : vector<32x128xf32>
    %c1_i32_34 = arith.constant 1 : i32
    %75 = tpu.dynamic_rotate %74 by %c1_i32_34 dim 0 : vector<32x128xf32>, i32 -> vector<32x128xf32>
    %cst_35 = arith.constant 0.000000e+00 : f32
    %76 = vector.shape_cast %31 : vector<32x1xi1> to vector<32x1xi1>
    %77 = vector.broadcast %76 : vector<32x1xi1> to vector<32x128xi1>
    %78 = vector.broadcast %cst_35 : f32 to vector<32x128xf32>
    %79 = arith.select %77, %75, %78 : vector<32x128xi1>, vector<32x128xf32>
    %c31_i32_36 = arith.constant 31 : i32
    %80 = tpu.dynamic_rotate %74 by %c31_i32_36 dim 0 : vector<32x128xf32>, i32 -> vector<32x128xf32>
    %cst_37 = arith.constant 0.000000e+00 : f32
    %81 = vector.shape_cast %40 : vector<32x1xi1> to vector<32x1xi1>
    %82 = vector.broadcast %81 : vector<32x1xi1> to vector<32x128xi1>
    %83 = vector.broadcast %cst_37 : f32 to vector<32x128xf32>
    %84 = arith.select %82, %80, %83 : vector<32x128xi1>, vector<32x128xf32>
    %85 = tpu.concatenate %79, %74, %84 in 1 : vector<32x128xf32>, vector<32x128xf32>, vector<32x128xf32> -> vector<32x384xf32>
    %c1 = arith.constant 1 : index
    %c0_38 = arith.constant 0 : index
    %c0_39 = arith.constant 0 : index
    %86 = vector.load %arg4[%c1, %c0_38, %c0_39] : memref<3x384x128xf32, #tpu.memory_space<vmem>>, vector<1x384x128xf32>
    %87 = vector.shape_cast %86 : vector<1x384x128xf32> to vector<384x128xf32>
    %cst_40 = arith.constant dense<0.000000e+00> : vector<32x128xf32>
    %88 = tpu.matmul %85, %87, %cst_40 {dimension_numbers = #tpu.dot_dimension_numbers<[1], [0], [0], [1], [0, 0, 1, 1], [], []>} : vector<32x384xf32>, vector<384x128xf32>, vector<32x128xf32> -> vector<32x128xf32>
    %c1_41 = arith.constant 1 : index
    %c0_42 = arith.constant 0 : index
    %c0_43 = arith.constant 0 : index
    %89 = vector.load %arg6[%c1_41, %c0_42, %c0_43] : memref<3x1x128xf32, #tpu.memory_space<vmem>>, vector<1x1x128xf32>
    %90 = vector.shape_cast %89 : vector<1x1x128xf32> to vector<1x128xf32>
    %91 = vector.broadcast %90 : vector<1x128xf32> to vector<32x128xf32>
    %92 = arith.addf %88, %91 : vector<32x128xf32>
    %c1_44 = arith.constant 1 : index
    %c0_45 = arith.constant 0 : index
    %c0_46 = arith.constant 0 : index
    %93 = vector.load %arg5[%c1_44, %c0_45, %c0_46] : memref<3x384x128xf32, #tpu.memory_space<vmem>>, vector<1x384x128xf32>
    %94 = vector.shape_cast %93 : vector<1x384x128xf32> to vector<384x128xf32>
    %cst_47 = arith.constant dense<0.000000e+00> : vector<32x128xf32>
    %95 = tpu.matmul %85, %94, %cst_47 {dimension_numbers = #tpu.dot_dimension_numbers<[1], [0], [0], [1], [0, 0, 1, 1], [], []>} : vector<32x384xf32>, vector<384x128xf32>, vector<32x128xf32> -> vector<32x128xf32>
    %c1_48 = arith.constant 1 : index
    %c0_49 = arith.constant 0 : index
    %c0_50 = arith.constant 0 : index
    %96 = vector.load %arg7[%c1_48, %c0_49, %c0_50] : memref<3x1x128xf32, #tpu.memory_space<vmem>>, vector<1x1x128xf32>
    %97 = vector.shape_cast %96 : vector<1x1x128xf32> to vector<1x128xf32>
    %98 = vector.broadcast %97 : vector<1x128xf32> to vector<32x128xf32>
    %99 = arith.addf %95, %98 : vector<32x128xf32>
    %100 = arith.negf %99 : vector<32x128xf32>
    %101 = math.exp %100 : vector<32x128xf32>
    %cst_51 = arith.constant 1.000000e+00 : f32
    %102 = vector.broadcast %cst_51 : f32 to vector<32x128xf32>
    %103 = arith.addf %102, %101 : vector<32x128xf32>
    %104 = arith.divf %102, %103 : vector<32x128xf32>
    %105 = arith.mulf %92, %104 : vector<32x128xf32>
    %106 = arith.addf %105, %74 : vector<32x128xf32>
    %cst_52 = arith.constant 0.707106769 : f32
    %107 = vector.broadcast %cst_52 : f32 to vector<32x128xf32>
    %108 = arith.mulf %106, %107 : vector<32x128xf32>
    %c1_i32_53 = arith.constant 1 : i32
    %109 = tpu.dynamic_rotate %108 by %c1_i32_53 dim 0 : vector<32x128xf32>, i32 -> vector<32x128xf32>
    %cst_54 = arith.constant 0.000000e+00 : f32
    %110 = vector.shape_cast %31 : vector<32x1xi1> to vector<32x1xi1>
    %111 = vector.broadcast %110 : vector<32x1xi1> to vector<32x128xi1>
    %112 = vector.broadcast %cst_54 : f32 to vector<32x128xf32>
    %113 = arith.select %111, %109, %112 : vector<32x128xi1>, vector<32x128xf32>
    %c31_i32_55 = arith.constant 31 : i32
    %114 = tpu.dynamic_rotate %108 by %c31_i32_55 dim 0 : vector<32x128xf32>, i32 -> vector<32x128xf32>
    %cst_56 = arith.constant 0.000000e+00 : f32
    %115 = vector.shape_cast %40 : vector<32x1xi1> to vector<32x1xi1>
    %116 = vector.broadcast %115 : vector<32x1xi1> to vector<32x128xi1>
    %117 = vector.broadcast %cst_56 : f32 to vector<32x128xf32>
    %118 = arith.select %116, %114, %117 : vector<32x128xi1>, vector<32x128xf32>
    %119 = tpu.concatenate %113, %108, %118 in 1 : vector<32x128xf32>, vector<32x128xf32>, vector<32x128xf32> -> vector<32x384xf32>
    %c2 = arith.constant 2 : index
    %c0_57 = arith.constant 0 : index
    %c0_58 = arith.constant 0 : index
    %120 = vector.load %arg4[%c2, %c0_57, %c0_58] : memref<3x384x128xf32, #tpu.memory_space<vmem>>, vector<1x384x128xf32>
    %121 = vector.shape_cast %120 : vector<1x384x128xf32> to vector<384x128xf32>
    %cst_59 = arith.constant dense<0.000000e+00> : vector<32x128xf32>
    %122 = tpu.matmul %119, %121, %cst_59 {dimension_numbers = #tpu.dot_dimension_numbers<[1], [0], [0], [1], [0, 0, 1, 1], [], []>} : vector<32x384xf32>, vector<384x128xf32>, vector<32x128xf32> -> vector<32x128xf32>
    %c2_60 = arith.constant 2 : index
    %c0_61 = arith.constant 0 : index
    %c0_62 = arith.constant 0 : index
    %123 = vector.load %arg6[%c2_60, %c0_61, %c0_62] : memref<3x1x128xf32, #tpu.memory_space<vmem>>, vector<1x1x128xf32>
    %124 = vector.shape_cast %123 : vector<1x1x128xf32> to vector<1x128xf32>
    %125 = vector.broadcast %124 : vector<1x128xf32> to vector<32x128xf32>
    %126 = arith.addf %122, %125 : vector<32x128xf32>
    %c2_63 = arith.constant 2 : index
    %c0_64 = arith.constant 0 : index
    %c0_65 = arith.constant 0 : index
    %127 = vector.load %arg5[%c2_63, %c0_64, %c0_65] : memref<3x384x128xf32, #tpu.memory_space<vmem>>, vector<1x384x128xf32>
    %128 = vector.shape_cast %127 : vector<1x384x128xf32> to vector<384x128xf32>
    %cst_66 = arith.constant dense<0.000000e+00> : vector<32x128xf32>
    %129 = tpu.matmul %119, %128, %cst_66 {dimension_numbers = #tpu.dot_dimension_numbers<[1], [0], [0], [1], [0, 0, 1, 1], [], []>} : vector<32x384xf32>, vector<384x128xf32>, vector<32x128xf32> -> vector<32x128xf32>
    %c2_67 = arith.constant 2 : index
    %c0_68 = arith.constant 0 : index
    %c0_69 = arith.constant 0 : index
    %130 = vector.load %arg7[%c2_67, %c0_68, %c0_69] : memref<3x1x128xf32, #tpu.memory_space<vmem>>, vector<1x1x128xf32>
    %131 = vector.shape_cast %130 : vector<1x1x128xf32> to vector<1x128xf32>
    %132 = vector.broadcast %131 : vector<1x128xf32> to vector<32x128xf32>
    %133 = arith.addf %129, %132 : vector<32x128xf32>
    %134 = arith.negf %133 : vector<32x128xf32>
    %135 = math.exp %134 : vector<32x128xf32>
    %cst_70 = arith.constant 1.000000e+00 : f32
    %136 = vector.broadcast %cst_70 : f32 to vector<32x128xf32>
    %137 = arith.addf %136, %135 : vector<32x128xf32>
    %138 = arith.divf %136, %137 : vector<32x128xf32>
    %139 = arith.mulf %126, %138 : vector<32x128xf32>
    %140 = arith.addf %139, %108 : vector<32x128xf32>
    %cst_71 = arith.constant 0.707106769 : f32
    %141 = vector.broadcast %cst_71 : f32 to vector<32x128xf32>
    %142 = arith.mulf %140, %141 : vector<32x128xf32>
    %c0_72 = arith.constant 0 : index
    %c0_73 = arith.constant 0 : index
    %143 = vector.load %arg8[%c0_72, %c0_73] : memref<32x128xf32, #tpu.memory_space<vmem>>, vector<32x128xf32>
    tpu.vector_store %arg8[%c0_72, %c0_73], %142 {strides = array<i32>} : memref<32x128xf32, #tpu.memory_space<vmem>>, vector<32x128xf32>,
    return
  }
  func.func @transform_0(%arg0: i32) -> (i32, i32) {
    %c0_i32 = arith.constant 0 : i32
    %c0_i32_0 = arith.constant 0 : i32
    return %arg0, %c0_i32 : i32, i32
  }
  func.func @transform_1(%arg0: i32) -> (i32, i32) {
    %c0_i32 = arith.constant 0 : i32
    %c0_i32_0 = arith.constant 0 : i32
    %c0_i32_1 = arith.constant 0 : i32
    return %c0_i32, %c0_i32_0 : i32, i32
  }
  func.func @transform_2(%arg0: i32) -> (i32, i32) {
    %c0_i32 = arith.constant 0 : i32
    %c0_i32_0 = arith.constant 0 : i32
    %c0_i32_1 = arith.constant 0 : i32
    return %c0_i32, %c0_i32_0 : i32, i32
  }
  func.func @transform_3(%arg0: i32) -> (i32, i32, i32) {
    %c0_i32 = arith.constant 0 : i32
    %c0_i32_0 = arith.constant 0 : i32
    %c0_i32_1 = arith.constant 0 : i32
    %c0_i32_2 = arith.constant 0 : i32
    return %c0_i32, %c0_i32_0, %c0_i32_1 : i32, i32, i32
  }
  func.func @transform_4(%arg0: i32) -> (i32, i32, i32) {
    %c0_i32 = arith.constant 0 : i32
    %c0_i32_0 = arith.constant 0 : i32
    %c0_i32_1 = arith.constant 0 : i32
    %c0_i32_2 = arith.constant 0 : i32
    return %c0_i32, %c0_i32_0, %c0_i32_1 : i32, i32, i32
  }
  func.func @transform_5(%arg0: i32) -> (i32, i32, i32) {
    %c0_i32 = arith.constant 0 : i32
    %c0_i32_0 = arith.constant 0 : i32
    %c0_i32_1 = arith.constant 0 : i32
    %c0_i32_2 = arith.constant 0 : i32
    return %c0_i32, %c0_i32_0, %c0_i32_1 : i32, i32, i32
  }
  func.func @transform_6(%arg0: i32) -> (i32, i32, i32) {
    %c0_i32 = arith.constant 0 : i32
    %c0_i32_0 = arith.constant 0 : i32
    %c0_i32_1 = arith.constant 0 : i32
    %c0_i32_2 = arith.constant 0 : i32
    return %c0_i32, %c0_i32_0, %c0_i32_1 : i32, i32, i32
  }
  func.func @transform_7(%arg0: i32) -> (i32, i32) {
    %c0_i32 = arith.constant 0 : i32
    %c0_i32_0 = arith.constant 0 : i32
    return %arg0, %c0_i32 : i32, i32
  }
}

</mosaic_0001>

<llo_original>
// kernel: tpu_custom_call.1
$region0: #{tpu_custom_call.1}
  #allocation0 [shape = 'u32[]', space=smem, size = 0x4, offset = 0x4, fixed_abs, tag = 'smem constant byte address 0x4 - core index']
  #allocation1 [shape = 'u32[144,128]{1,0:T(1,128)}', space=vmem, size = 0x12000, scoped, tag = 'internal scratch']
  %s0 = inlined_call_operand.hbm [shape: f32[64,128], index: 0, kind: input, shape index: {}]
  %s1 = inlined_call_operand.hbm [shape: f32[128,128], index: 1, kind: input, shape index: {}]
  %s2 = inlined_call_operand.vmem [shape: f32[1,128], index: 2, kind: input, shape index: {}]
  %s3 = inlined_call_operand.hbm [shape: f32[3,384,128], index: 3, kind: input, shape index: {}]
  %s4 = inlined_call_operand.hbm [shape: f32[3,384,128], index: 4, kind: input, shape index: {}]
  %s5 = inlined_call_operand.vmem [shape: f32[3,1,128], index: 5, kind: input, shape index: {}]
  %s6 = inlined_call_operand.vmem [shape: f32[3,1,128], index: 6, kind: input, shape index: {}]
  %s7 = inlined_call_operand.hbm [shape: f32[64,128], index: 7, kind: output, shape index: {}]
  %s8 = sld [smem:[#allocation0]]
  $region77: #{tpu_custom_call.1} parent=0
    _
  %s10 = ssub.s32 1, %s8
  %s11 = scalar_select 0, %s10, %s8
  $region1: #{tpu_custom_call.1} parent=0
    #allocation2 [shape = 'u8[32768]{0}', space=vmem, size = 0x8000, scoped, tag = 'input window, operand 0']
    #allocation3 [shape = 's32[2]{0}', space=sflag, size = 0x8, scoped, tag = 'scoped memory for tpu_custom_call.1']
    #allocation4 [shape = 's32[2]{0}', space=sflag, size = 0x8, scoped, tag = 'scoped memory for tpu_custom_call.1']
    #allocation5 [shape = 'u8[65536]{0}', space=vmem, size = 0x10000, scoped, tag = 'input window, operand 1, single buffered']
    #allocation6 [shape = 's32[1]{0}', space=sflag, size = 0x4, scoped, tag = 'scoped memory for tpu_custom_call.1']
    #allocation7 [shape = 'u8[589824]{0}', space=vmem, size = 0x90000, scoped, tag = 'input window, operand 3, single buffered']
    #allocation8 [shape = 'u8[589824]{0}', space=vmem, size = 0x90000, scoped, tag = 'input window, operand 4, single buffered']
    #allocation9 [shape = 's32[1]{0}', space=sflag, size = 0x4, scoped, tag = 'scoped memory for tpu_custom_call.1']
    #allocation10 [shape = 'u8[32768]{0}', space=vmem, size = 0x8000, scoped, tag = 'output window, operand 0']
    %12 = vsyncpa [#allocation3], 0
    %s13 = scalar_lea.sflag [#allocation3], 1
    %14 = vsyncpa %s13, 0
    %15 = vsyncpa [#allocation6], 0
    %16 = vsyncpa [#allocation9], 0
    %17 = vsyncpa [#allocation4], 0
    %s18 = scalar_lea.sflag [#allocation4], 1
    %19 = vsyncpa %s18, 0
    loop: start=0, step=1, limit=4
    $region2: #{tpu_custom_call.1} parent=1 // loop_pre_header
      _
    $region3: #{tpu_custom_call.1} parent=1 // loop_header
      %s21 = sphi 0, %s25
      %p22 = scmp.ge.s32.totalorder %s21, 4
      %s31 = sphi 0, %s33
      %s34 = sphi 0, %s31
      %s35 = sphi 0, %s34
      %s51 = sphi 0, %s35
      %s55 = sphi 0, %s55
      %s57 = sphi 0, %s55
      %s58 = sphi 0, %s57
      %s72 = sphi 0, %s58
      %s76 = sphi 0, %s76
      %s78 = sphi 0, %s76
      %s79 = sphi 0, %s78
      %s93 = sphi 0, %s79
      %s97 = sphi 0, %s97
      %s99 = sphi 0, %s97
      %s100 = sphi 0, %s99
      %s114 = sphi 0, %s100
      %s118 = sphi 0, %s118
      %s120 = sphi 0, %s118
      %s121 = sphi 0, %s120
      %s135 = sphi 0, %s121
      %s139 = sphi 0, %s139
      %s141 = sphi 0, %s139
      %s142 = sphi 0, %s141
      %s156 = sphi 0, %s142
      %s160 = sphi 0, %s160
      %s162 = sphi 0, %s160
      %s163 = sphi 0, %s162
      %s177 = sphi 0, %s163
      %s183 = sphi 0, %s185
      %s186 = sphi 0, %s183
      %s187 = sphi 0, %s186
      %s203 = sphi 0, %s187
    $region4: #{tpu_custom_call.1} parent=1 // loop_header_branch
      %24 = sbr.rel (%p22) target = $region8
    $region5: #{tpu_custom_call.1} parent=1 // loop_body
      %s26 = ssub.s32 %s21, 1
      %s27 = ssub.s32 %s21, 2
      %s28 = sadd.s32 %s21, 1
      %s29 = ssub.s32 %s21, %s28
      %p30 = scmp.eq.s32.totalorder %s29, 0
      %s32 = sadd.s32 %s31, 1
      %s33 = scalar_select %p30, %s31, %s32
      %p36 = pneg %p30
      %p37 = scmp.eq.s32.totalorder %s21, 1
      %p38 = por %p36, %p37
      %p39 = scmp.ne.s32.totalorder %s31, %s34
      %p40 = scmp.eq.s32.totalorder %s21, 0
      %p41 = por %p39, %p40
      %p42 = scmp.ne.s32.totalorder %s31, %s34
      %p43 = scmp.eq.s32.totalorder %s26, 1
      %p44 = por %p42, %p43
      %p45 = scmp.ne.s32.totalorder %s34, %s35
      %p46 = scmp.eq.s32.totalorder %s26, 0
      %p47 = por %p45, %p46
      %p48 = scmp.ne.s32.totalorder %s34, %s35
      %p49 = scmp.eq.s32.totalorder %s27, 1
      %p50 = por %p48, %p49
      %p52 = scmp.ne.s32.totalorder %s35, %s51
      %p53 = scmp.eq.s32.totalorder %s27, 0
      %p54 = por %p52, %p53
      %s56 = sadd.s32 %s55, 1
      %p59 = scmp.eq.s32.totalorder %s21, 1
      %p60 = scmp.ne.s32.totalorder %s55, %s57
      %p61 = scmp.eq.s32.totalorder %s21, 0
      %p62 = por %p60, %p61
      %p63 = scmp.ne.s32.totalorder %s55, %s57
      %p64 = scmp.eq.s32.totalorder %s26, 1
      %p65 = por %p63, %p64
      %p66 = scmp.ne.s32.totalorder %s57, %s58
      %p67 = scmp.eq.s32.totalorder %s26, 0
      %p68 = por %p66, %p67
      %p69 = scmp.ne.s32.totalorder %s57, %s58
      %p70 = scmp.eq.s32.totalorder %s27, 1
      %p71 = por %p69, %p70
      %p73 = scmp.ne.s32.totalorder %s58, %s72
      %p74 = scmp.eq.s32.totalorder %s27, 0
      %p75 = por %p73, %p74
      %s77 = sadd.s32 %s76, 1
      %p80 = scmp.eq.s32.totalorder %s21, 1
      %p81 = scmp.ne.s32.totalorder %s76, %s78
      %p82 = scmp.eq.s32.totalorder %s21, 0
      %p83 = por %p81, %p82
      %p84 = scmp.ne.s32.totalorder %s76, %s78
      %p85 = scmp.eq.s32.totalorder %s26, 1
      %p86 = por %p84, %p85
      %p87 = scmp.ne.s32.totalorder %s78, %s79
      %p88 = scmp.eq.s32.totalorder %s26, 0
      %p89 = por %p87, %p88
      %p90 = scmp.ne.s32.totalorder %s78, %s79
      %p91 = scmp.eq.s32.totalorder %s27, 1
      %p92 = por %p90, %p91
      %p94 = scmp.ne.s32.totalorder %s79, %s93
      %p95 = scmp.eq.s32.totalorder %s27, 0
      %p96 = por %p94, %p95
      %s98 = sadd.s32 %s97, 1
      %p101 = scmp.eq.s32.totalorder %s21, 1
      %p102 = scmp.ne.s32.totalorder %s97, %s99
      %p103 = scmp.eq.s32.totalorder %s21, 0
      %p104 = por %p102, %p103
      %p105 = scmp.ne.s32.totalorder %s97, %s99
      %p106 = scmp.eq.s32.totalorder %s26, 1
      %p107 = por %p105, %p106
      %p108 = scmp.ne.s32.totalorder %s99, %s100
      %p109 = scmp.eq.s32.totalorder %s26, 0
      %p110 = por %p108, %p109
      %p111 = scmp.ne.s32.totalorder %s99, %s100
      %p112 = scmp.eq.s32.totalorder %s27, 1
      %p113 = por %p111, %p112
      %p115 = scmp.ne.s32.totalorder %s100, %s114
      %p116 = scmp.eq.s32.totalorder %s27, 0
      %p117 = por %p115, %p116
      %s119 = sadd.s32 %s118, 1
      %p122 = scmp.eq.s32.totalorder %s21, 1
      %p123 = scmp.ne.s32.totalorder %s118, %s120
      %p124 = scmp.eq.s32.totalorder %s21, 0
      %p125 = por %p123, %p124
      %p126 = scmp.ne.s32.totalorder %s118, %s120
      %p127 = scmp.eq.s32.totalorder %s26, 1
      %p128 = por %p126, %p127
      %p129 = scmp.ne.s32.totalorder %s120, %s121
      %p130 = scmp.eq.s32.totalorder %s26, 0
      %p131 = por %p129, %p130
      %p132 = scmp.ne.s32.totalorder %s120, %s121
      %p133 = scmp.eq.s32.totalorder %s27, 1
      %p134 = por %p132, %p133
      %p136 = scmp.ne.s32.totalorder %s121, %s135
      %p137 = scmp.eq.s32.totalorder %s27, 0
      %p138 = por %p136, %p137
      %s140 = sadd.s32 %s139, 1
      %p143 = scmp.eq.s32.totalorder %s21, 1
      %p144 = scmp.ne.s32.totalorder %s139, %s141
      %p145 = scmp.eq.s32.totalorder %s21, 0
      %p146 = por %p144, %p145
      %p147 = scmp.ne.s32.totalorder %s139, %s141
      %p148 = scmp.eq.s32.totalorder %s26, 1
      %p149 = por %p147, %p148
      %p150 = scmp.ne.s32.totalorder %s141, %s142
      %p151 = scmp.eq.s32.totalorder %s26, 0
      %p152 = por %p150, %p151
      %p153 = scmp.ne.s32.totalorder %s141, %s142
      %p154 = scmp.eq.s32.totalorder %s27, 1
      %p155 = por %p153, %p154
      %p157 = scmp.ne.s32.totalorder %s142, %s156
      %p158 = scmp.eq.s32.totalorder %s27, 0
      %p159 = por %p157, %p158
      %s161 = sadd.s32 %s160, 1
      %p164 = scmp.eq.s32.totalorder %s21, 1
      %p165 = scmp.ne.s32.totalorder %s160, %s162
      %p166 = scmp.eq.s32.totalorder %s21, 0
      %p167 = por %p165, %p166
      %p168 = scmp.ne.s32.totalorder %s160, %s162
      %p169 = scmp.eq.s32.totalorder %s26, 1
      %p170 = por %p168, %p169
      %p171 = scmp.ne.s32.totalorder %s162, %s163
      %p172 = scmp.eq.s32.totalorder %s26, 0
      %p173 = por %p171, %p172
      %p174 = scmp.ne.s32.totalorder %s162, %s163
      %p175 = scmp.eq.s32.totalorder %s27, 1
      %p176 = por %p174, %p175
      %p178 = scmp.ne.s32.totalorder %s163, %s177
      %p179 = scmp.eq.s32.totalorder %s27, 0
      %p180 = por %p178, %p179
      %s181 = ssub.s32 %s21, %s28
      %p182 = scmp.eq.s32.totalorder %s181, 0
      %s184 = sadd.s32 %s183, 1
      %s185 = scalar_select %p182, %s183, %s184
      %p188 = pneg %p182
      %p189 = scmp.eq.s32.totalorder %s21, 1
      %p190 = por %p188, %p189
      %p191 = scmp.ne.s32.totalorder %s183, %s186
      %p192 = scmp.eq.s32.totalorder %s21, 0
      %p193 = por %p191, %p192
      %p194 = scmp.ne.s32.totalorder %s183, %s186
      %p195 = scmp.eq.s32.totalorder %s26, 1
      %p196 = por %p194, %p195
      %p197 = scmp.ne.s32.totalorder %s186, %s187
      %p198 = scmp.eq.s32.totalorder %s26, 0
      %p199 = por %p197, %p198
      %p200 = scmp.ne.s32.totalorder %s186, %s187
      %p201 = scmp.eq.s32.totalorder %s27, 1
      %p202 = por %p200, %p201
      %p204 = scmp.ne.s32.totalorder %s187, %s203
      %p205 = scmp.eq.s32.totalorder %s27, 0
      %p206 = por %p204, %p205
      %p207 = scmp.le.s32.totalorder 1, %s21
      %p208 = scmp.lt.s32.totalorder %s21, 3
      %p209 = pnand %p207, %p208
      %p210 = pneg %p209
      // Predicated region
      $region9: #{tpu_custom_call.1} parent=5 // pred_check
        _
      $region10: #{tpu_custom_call.1} parent=5 // pred_check_branch
        %212 = sbr.rel (%p209) target = $region12
      $region11: #{tpu_custom_call.1} parent=5 // pred_region
        %s213 = ssub.s32 %s21, 1
        // Predicated region
        $region13: #{tpu_custom_call.1} parent=11 // pred_check
          %p214 = pneg %p68
        $region14: #{tpu_custom_call.1} parent=11 // pred_check_branch
          %216 = sbr.rel (%p214) target = $region16
        $region15: #{tpu_custom_call.1} parent=11 // pred_region
          %s218 = ssub.s32 2048, 2048
          %219 = vsyncadd [#allocation6], %s218
          %s220 = sshll.u32 [#allocation5], 4
          %s221 = int_to_ptr.vmem [resolvable:$true] %s220
          %226 = dma.hbm_to_vmem [thread:$0]  %s1, 2048, %s221, [#allocation6], 128, 128, 8
        $region16: #{tpu_custom_call.1} parent=11 // pred_fallthru
          _
        // Predicated region
        $region17: #{tpu_custom_call.1} parent=11 // pred_check
          %p227 = pneg %p89
        $region18: #{tpu_custom_call.1} parent=11 // pred_check_branch
          %229 = sbr.rel (%p227) target = $region20
        $region19: #{tpu_custom_call.1} parent=11 // pred_region
          _
        $region20: #{tpu_custom_call.1} parent=11 // pred_fallthru
          _
        // Predicated region
        $region21: #{tpu_custom_call.1} parent=11 // pred_check
          %p230 = pneg %p110
        $region22: #{tpu_custom_call.1} parent=11 // pred_check_branch
          %232 = sbr.rel (%p230) target = $region24
        $region23: #{tpu_custom_call.1} parent=11 // pred_region
          %s234 = ssub.s32 18432, 18432
          %235 = vsyncadd [#allocation6], %s234
          %s236 = sshll.u32 [#allocation7], 4
          %s237 = int_to_ptr.vmem [resolvable:$true] %s236
          %242 = dma.hbm_to_vmem [thread:$0]  %s3, 18432, %s237, [#allocation6], 128, 128, 8
        $region24: #{tpu_custom_call.1} parent=11 // pred_fallthru
          _
        // Predicated region
        $region25: #{tpu_custom_call.1} parent=11 // pred_check
          %p243 = pneg %p131
        $region26: #{tpu_custom_call.1} parent=11 // pred_check_branch
          %245 = sbr.rel (%p243) target = $region28
        $region27: #{tpu_custom_call.1} parent=11 // pred_region
          %s247 = ssub.s32 18432, 18432
          %248 = vsyncadd [#allocation9], %s247
          %s249 = sshll.u32 [#allocation8], 4
          %s250 = int_to_ptr.vmem [resolvable:$true] %s249
          %255 = dma.hbm_to_vmem [thread:$0]  %s4, 18432, %s250, [#allocation9], 128, 128, 8
        $region28: #{tpu_custom_call.1} parent=11 // pred_fallthru
          _
        // Predicated region
        $region29: #{tpu_custom_call.1} parent=11 // pred_check
          %p256 = pneg %p152
        $region30: #{tpu_custom_call.1} parent=11 // pred_check_branch
          %258 = sbr.rel (%p256) target = $region32
        $region31: #{tpu_custom_call.1} parent=11 // pred_region
          _
        $region32: #{tpu_custom_call.1} parent=11 // pred_fallthru
          _
        // Predicated region
        $region33: #{tpu_custom_call.1} parent=11 // pred_check
          %p259 = pneg %p173
        $region34: #{tpu_custom_call.1} parent=11 // pred_check_branch
          %261 = sbr.rel (%p259) target = $region36
        $region35: #{tpu_custom_call.1} parent=11 // pred_region
          _
        $region36: #{tpu_custom_call.1} parent=11 // pred_fallthru
          _
      $region12: #{tpu_custom_call.1} parent=5 // pred_fallthru
        _
      %p262 = scmp.lt.s32.totalorder %s21, 2
      // Predicated region
      $region37: #{tpu_custom_call.1} parent=5 // pred_check
        %p263 = pneg %p262
      $region38: #{tpu_custom_call.1} parent=5 // pred_check_branch
        %265 = sbr.rel (%p263) target = $region40
      $region39: #{tpu_custom_call.1} parent=5 // pred_region
        // Predicated region
        $region41: #{tpu_custom_call.1} parent=39 // pred_check
          %p266 = pneg %p41
        $region42: #{tpu_custom_call.1} parent=39 // pred_check_branch
          %268 = sbr.rel (%p266) target = $region44
        $region43: #{tpu_custom_call.1} parent=39 // pred_region
          %s269 = sand.u32 %s31, 1
          %s270 = scalar_lea.sflag [#allocation3], %s269
          %s271 = sand.u32 %s31, 1
          %s272 = smul.addr %s271, 32
          %s273 = scalar_lea.vmem [#allocation2], %s272
          %s274 = smul.u32 4, %s21
          %s276 = ssub.s32 512, 512
          %277 = vsyncadd %s270, %s276
          %s278 = smul.addr %s274, 128
          %s279 = scalar_lea.hbm %s0, %s278
          %s280 = sshll.u32 %s273, 4
          %s281 = int_to_ptr.vmem [resolvable:$true] %s280
          %286 = dma.hbm_to_vmem [thread:$0]  %s279, 512, %s281, %s270, 128, 128, 8
        $region44: #{tpu_custom_call.1} parent=39 // pred_fallthru
          _
      $region40: #{tpu_custom_call.1} parent=5 // pred_fallthru
        _
      %p287 = scmp.le.s32.totalorder 1, %s21
      %p288 = scmp.lt.s32.totalorder %s21, 3
      %p289 = pnand %p287, %p288
      %p290 = pneg %p289
      // Predicated region
      $region45: #{tpu_custom_call.1} parent=5 // pred_check
        _
      $region46: #{tpu_custom_call.1} parent=5 // pred_check_branch
        %292 = sbr.rel (%p289) target = $region48
      $region47: #{tpu_custom_call.1} parent=5 // pred_region
        %s293 = ssub.s32 %s21, 1
        %s294 = sand.u32 %s34, 1
        %s295 = scalar_lea.sflag [#allocation3], %s294
        %s296 = sand.u32 %s34, 1
        %s297 = smul.addr %s296, 32
        %s298 = scalar_lea.vmem [#allocation2], %s297
        // Predicated region
        $region49: #{tpu_custom_call.1} parent=47 // pred_check
          %p299 = pneg %p47
        $region50: #{tpu_custom_call.1} parent=47 // pred_check_branch
          %301 = sbr.rel (%p299) target = $region52
        $region51: #{tpu_custom_call.1} parent=47 // pred_region
          %302 = dma.done %s295, 512
        $region52: #{tpu_custom_call.1} parent=47 // pred_fallthru
          _
        // Predicated region
        $region53: #{tpu_custom_call.1} parent=47 // pred_check
          %p303 = pneg %p68
        $region54: #{tpu_custom_call.1} parent=47 // pred_check_branch
          %305 = sbr.rel (%p303) target = $region56
        $region55: #{tpu_custom_call.1} parent=47 // pred_region
          %306 = dma.done [#allocation6], 2048
        $region56: #{tpu_custom_call.1} parent=47 // pred_fallthru
          _
        // Predicated region
        $region57: #{tpu_custom_call.1} parent=47 // pred_check
          %p307 = pneg %p110
        $region58: #{tpu_custom_call.1} parent=47 // pred_check_branch
          %309 = sbr.rel (%p307) target = $region60
        $region59: #{tpu_custom_call.1} parent=47 // pred_region
          %310 = dma.done [#allocation6], 18432
        $region60: #{tpu_custom_call.1} parent=47 // pred_fallthru
          _
        // Predicated region
        $region61: #{tpu_custom_call.1} parent=47 // pred_check
          %p311 = pneg %p131
        $region62: #{tpu_custom_call.1} parent=47 // pred_check_branch
          %313 = sbr.rel (%p311) target = $region64
        $region63: #{tpu_custom_call.1} parent=47 // pred_region
          %314 = dma.done [#allocation9], 18432
        $region64: #{tpu_custom_call.1} parent=47 // pred_fallthru
          _
        %s315 = sand.u32 %s34, 1
        %s316 = scalar_lea.sflag [#allocation3], %s315
        %s317 = sand.u32 %s34, 1
        %s318 = smul.addr %s317, 32
        %s319 = scalar_lea.vmem [#allocation2], %s318
        %p320 = pneg %p47
        %p321 = pneg %p44
        %p322 = pneg %p68
        %p323 = pneg %p65
        %p324 = pneg %p89
        %p325 = pneg %p86
        %p326 = pneg %p110
        %p327 = pneg %p107
        %p328 = pneg %p131
        %p329 = pneg %p128
        %p330 = pneg %p152
        %p331 = pneg %p149
        %p332 = pneg %p173
        %p333 = pneg %p170
        %p334 = pneg %p199
        %p335 = pneg %p196
        %s336 = sand.u32 %s186, 1
        %s337 = scalar_lea.sflag [#allocation4], %s336
        %s338 = sand.u32 %s186, 1
        %s339 = smul.addr %s338, 32
        %s340 = scalar_lea.vmem [#allocation10], %s339
        %s341 = smul.u32 4, %s26
        %s342 = smul.u32 4, %s26
        %v343 = vld [vmem:[%s298] sm:$0xff]
        %v344 = vld [vmem:[%s298 + $0x8] sm:$0xff]
        %v345 = vld [vmem:[%s298 + $0x10] sm:$0xff]
        %v346 = vld [vmem:[%s298 + $0x18] sm:$0xff]
        %v347 = vld [vmem:[#allocation5] sm:$0xff]
        %v348 = vld [vmem:[#allocation5 + $0x8] sm:$0xff]
        %v349 = vld [vmem:[#allocation5 + $0x10] sm:$0xff]
        %v350 = vld [vmem:[#allocation5 + $0x18] sm:$0xff]
        %v351 = vld [vmem:[#allocation5 + $0x20] sm:$0xff]
        %v352 = vld [vmem:[#allocation5 + $0x28] sm:$0xff]
        %v353 = vld [vmem:[#allocation5 + $0x30] sm:$0xff]
        %v354 = vld [vmem:[#allocation5 + $0x38] sm:$0xff]
        %v355 = vld [vmem:[#allocation5 + $0x40] sm:$0xff]
        %v356 = vld [vmem:[#allocation5 + $0x48] sm:$0xff]
        %v357 = vld [vmem:[#allocation5 + $0x50] sm:$0xff]
        %v358 = vld [vmem:[#allocation5 + $0x58] sm:$0xff]
        %v359 = vld [vmem:[#allocation5 + $0x60] sm:$0xff]
        %v360 = vld [vmem:[#allocation5 + $0x68] sm:$0xff]
        %v361 = vld [vmem:[#allocation5 + $0x70] sm:$0xff]
        %v362 = vld [vmem:[#allocation5 + $0x78] sm:$0xff]
        %v363 = vld [vmem:[%s2] sm:$0x1]
        %v365 = vlaneseq
        %v366 = vshrl.u32 %v365, 7
        %v367 = vsub.s32 0, %v366
        %v368 = vrot.slane %v363, %v367
        %370 = vmatprep.subr.mxu0 0.0
        %371 = vmatpush1.msra.mxu0 %v347
        %372 = vmatprep.subr.mxu0 0.0
        %373 = vmatpush1.msra.mxu0 %v348
        %374 = vmatprep.subr.mxu0 0.0
        %375 = vmatpush1.msra.mxu0 %v349
        %376 = vmatprep.subr.mxu0 0.0
        %377 = vmatpush1.msra.mxu0 %v350
        %378 = vmatprep.subr.mxu0 0.0
        %379 = vmatpush1.msra.mxu0 %v351
        %380 = vmatprep.subr.mxu0 0.0
        %381 = vmatpush1.msra.mxu0 %v352
        %382 = vmatprep.subr.mxu0 0.0
        %383 = vmatpush1.msra.mxu0 %v353
        %384 = vmatprep.subr.mxu0 0.0
        %385 = vmatpush1.msra.mxu0 %v354
        %386 = vmatprep.subr.mxu0 0.0
        %387 = vmatpush1.msra.mxu0 %v355
        %388 = vmatprep.subr.mxu0 0.0
        %389 = vmatpush1.msra.mxu0 %v356
        %390 = vmatprep.subr.mxu0 0.0
        %391 = vmatpush1.msra.mxu0 %v357
        %392 = vmatprep.subr.mxu0 0.0
        %393 = vmatpush1.msra.mxu0 %v358
        %394 = vmatprep.subr.mxu0 0.0
        %395 = vmatpush1.msra.mxu0 %v359
        %396 = vmatprep.subr.mxu0 0.0
        %397 = vmatpush1.msra.mxu0 %v360
        %398 = vmatprep.subr.mxu0 0.0
        %399 = vmatpush1.msra.mxu0 %v361
        %400 = vmatprep.subr.mxu0 0.0
        %401 = vmatpush1.msra.mxu0 %v362
        %402 = vmatprep.subr.mxu0 0.0
        %403 = vmatpush1.msra.mxu0 0.0
        %404 = vmatprep.subr.mxu0 0.0
        %405 = vmatpush1.msra.mxu0 0.0
        %406 = vmatprep.subr.mxu0 0.0
        %407 = vmatpush1.msra.mxu0 0.0
        %408 = vmatprep.subr.mxu0 0.0
        %409 = vmatpush1.msra.mxu0 0.0
        %410 = vmatprep.subr.mxu0 0.0
        %411 = vmatpush1.msra.mxu0 0.0
        %412 = vmatprep.subr.mxu0 0.0
        %413 = vmatpush1.msra.mxu0 0.0
        %414 = vmatprep.subr.mxu0 0.0
        %415 = vmatpush1.msra.mxu0 0.0
        %416 = vmatprep.subr.mxu0 0.0
        %417 = vmatpush1.msra.mxu0 0.0
        %418 = vmatprep.subr.mxu0 0.0
        %419 = vmatpush1.msra.mxu0 0.0
        %420 = vmatprep.subr.mxu0 0.0
        %421 = vmatpush1.msra.mxu0 0.0
        %422 = vmatprep.subr.mxu0 0.0
        %423 = vmatpush1.msra.mxu0 0.0
        %424 = vmatprep.subr.mxu0 0.0
        %425 = vmatpush1.msra.mxu0 0.0
        %426 = vmatprep.subr.mxu0 0.0
        %427 = vmatpush1.msra.mxu0 0.0
        %428 = vmatprep.subr.mxu0 0.0
        %429 = vmatpush1.msra.mxu0 0.0
        %430 = vmatprep.subr.mxu0 0.0
        %431 = vmatpush1.msra.mxu0 0.0
        %432 = vmatprep.subr.mxu0 0.0
        %433 = vmatpush1.msra.mxu0 0.0
        %434 = vmatprep.mubr.f32.mxu0 0.0
        %435 = vmatmul.mubr.f32.gmra.mrb[0].mxu0 %v343
        %v436 = vpop.f32.mrb[0].mxu0
        %v437 = vadd.f32 %v368, %v436
        %v438 = vpop.f32.mrb[0].mxu0
        %439 = vmatprep.mubr.f32.mxu0 0.0
        %440 = vmatmul.mubr.f32.gmra.mrb[0].mxu0 %v344
        %v441 = vpop.f32.mrb[0].mxu0
        %v442 = vadd.f32 %v368, %v441
        %v443 = vpop.f32.mrb[0].mxu0
        %444 = vmatprep.mubr.f32.mxu0 0.0
        %445 = vmatmul.mubr.f32.gmra.mrb[0].mxu0 %v345
        %v446 = vpop.f32.mrb[0].mxu0
        %v447 = vadd.f32 %v368, %v446
        %v448 = vpop.f32.mrb[0].mxu0
        %449 = vmatprep.mubr.f32.mxu0 0.0
        %450 = vmatmul.mubr.f32.gmra.mrb[0].mxu0 %v346
        %v451 = vpop.f32.mrb[0].mxu0
        %v452 = vadd.f32 %v368, %v451
        %v453 = vpop.f32.mrb[0].mxu0
        %454 = vdwg.mxu0
        %v455 = vlaneseq
        %v456 = vshrl.u32 %v455, 7
        %v457 = vadd.s32 %v456, 8
        %v458 = vadd.s32 %v456, 16
        %v459 = vadd.s32 %v456, 24
        %vm460 = vcmp.lt.s32.totalorder %v456, 0
        %v461 = vsub.s32 0, %v456
        %v462 = vsel %vm460, %v461, %v456
        %v463 = vshrl.u32 %v462, 4
        %v464 = vand.u32 %v462, 15
        %v465 = vsub.s32 0, %v464
        %v466 = vsel %vm460, %v465, %v464
        %vm467 = vcmp.lt.s32.totalorder %v457, 0
        %v468 = vsub.s32 0, %v457
        %v469 = vsel %vm467, %v468, %v457
        %v470 = vshrl.u32 %v469, 4
        %v471 = vand.u32 %v469, 15
        %v472 = vsub.s32 0, %v471
        %v473 = vsel %vm467, %v472, %v471
        %vm474 = vcmp.lt.s32.totalorder %v458, 0
        %v475 = vsub.s32 0, %v458
        %v476 = vsel %vm474, %v475, %v458
        %v477 = vshrl.u32 %v476, 4
        %v478 = vand.u32 %v476, 15
        %v479 = vsub.s32 0, %v478
        %v480 = vsel %vm474, %v479, %v478
        %vm481 = vcmp.lt.s32.totalorder %v459, 0
        %v482 = vsub.s32 0, %v459
        %v483 = vsel %vm481, %v482, %v459
        %v484 = vshrl.u32 %v483, 4
        %v485 = vand.u32 %v483, 15
        %v486 = vsub.s32 0, %v485
        %v487 = vsel %vm481, %v486, %v485
        %vm488 = vcmp.ne.s32.totalorder %v466, 0
        %vm489 = vcmp.ne.s32.totalorder %v473, 0
        %vm490 = vcmp.ne.s32.totalorder %v480, 0
        %vm491 = vcmp.ne.s32.totalorder %v487, 0
        %vm492 = vcmp.lt.s32.totalorder %v466, 0
        %vm493 = vcmp.lt.s32.totalorder %v473, 0
        %vm494 = vcmp.lt.s32.totalorder %v480, 0
        %vm495 = vcmp.lt.s32.totalorder %v487, 0
        %vm496 = vmand %vm492, %vm488
        %vm497 = vmand %vm493, %vm489
        %vm498 = vmand %vm494, %vm490
        %vm499 = vmand %vm495, %vm491
        %v500 = vadd.s32 %v466, 16
        %v501 = vadd.s32 %v473, 16
        %v502 = vadd.s32 %v480, 16
        %v503 = vadd.s32 %v487, 16
        %v504 = vsel %vm496, %v500, %v466
        %v505 = vsel %vm497, %v501, %v473
        %v506 = vsel %vm498, %v502, %v480
        %v507 = vsel %vm499, %v503, %v487
        %v508 = vadd.s32 %v504, 4294967295
        %v509 = vadd.s32 %v505, 4294967295
        %v510 = vadd.s32 %v506, 4294967295
        %v511 = vadd.s32 %v507, 4294967295
        %vm512 = vcmp.ge.s32.totalorder %v508, 0
        %vm513 = vcmp.ge.s32.totalorder %v509, 0
        %vm514 = vcmp.ge.s32.totalorder %v510, 0
        %vm515 = vcmp.ge.s32.totalorder %v511, 0
        %vm516 = vcmp.lt.s32.totalorder %v508, 16
        %vm517 = vcmp.lt.s32.totalorder %v509, 16
        %vm518 = vcmp.lt.s32.totalorder %v510, 16
        %vm519 = vcmp.lt.s32.totalorder %v511, 16
        %vm520 = vmand %vm512, %vm516
        %vm521 = vmand %vm513, %vm517
        %vm522 = vmand %vm514, %vm518
        %vm523 = vmand %vm515, %vm519
        %v524 = vadd.s32 %v504, 1
        %v525 = vadd.s32 %v505, 1
        %v526 = vadd.s32 %v506, 1
        %v527 = vadd.s32 %v507, 1
        %vm528 = vcmp.ge.s32.totalorder %v524, 0
        %vm529 = vcmp.ge.s32.totalorder %v525, 0
        %vm530 = vcmp.ge.s32.totalorder %v526, 0
        %vm531 = vcmp.ge.s32.totalorder %v527, 0
        %vm532 = vcmp.lt.s32.totalorder %v524, 16
        %vm533 = vcmp.lt.s32.totalorder %v525, 16
        %vm534 = vcmp.lt.s32.totalorder %v526, 16
        %vm535 = vcmp.lt.s32.totalorder %v527, 16
        %vm536 = vmand %vm528, %vm532
        %vm537 = vmand %vm529, %vm533
        %vm538 = vmand %vm530, %vm534
        %vm539 = vmand %vm531, %vm535
        %v540 = vrot.slane %v437, 7
        %v541 = vrot.slane %v442, 7
        %v542 = vrot.slane %v447, 7
        %v543 = vrot.slane %v452, 7
        %vm544 = vcmp.lt.s32.totalorder %v456, 1
        %v545 = vsel %vm544, %v542, %v543
        %v546 = vsel %vm544, %v541, %v542
        %v547 = vsel %vm544, %v540, %v541
        %v548 = vsel %vm544, %v543, %v540
        %v549 = vsel %vm520, 1, 0
        %v550 = vsel %vm521, 1, 0
        %v551 = vsel %vm522, 1, 0
        %v552 = vsel %vm523, 1, 0
        %vm553 = vcmp.eq.s32.totalorder %v549, 1
        %vm554 = vcmp.eq.s32.totalorder %v550, 1
        %vm555 = vcmp.eq.s32.totalorder %v551, 1
        %vm556 = vcmp.eq.s32.totalorder %v552, 1
        %v557 = vsel %vm553, %v548, 0.0
        %v558 = vsel %vm554, %v547, 0.0
        %v559 = vsel %vm555, %v546, 0.0
        %v560 = vsel %vm556, %v545, 0.0
        %v561 = vrot.slane %v437, 1
        %v562 = vrot.slane %v442, 1
        %v563 = vrot.slane %v447, 1
        %v564 = vrot.slane %v452, 1
        %vm565 = vcmp.lt.s32.totalorder %v456, 7
        %v566 = vsel %vm565, %v563, %v564
        %v567 = vsel %vm565, %v562, %v563
        %v568 = vsel %vm565, %v561, %v562
        %v569 = vsel %vm565, %v564, %v561
        %v570 = vsel %vm536, 1, 0
        %v571 = vsel %vm537, 1, 0
        %v572 = vsel %vm538, 1, 0
        %v573 = vsel %vm539, 1, 0
        %vm574 = vcmp.eq.s32.totalorder %v570, 1
        %vm575 = vcmp.eq.s32.totalorder %v571, 1
        %vm576 = vcmp.eq.s32.totalorder %v572, 1
        %vm577 = vcmp.eq.s32.totalorder %v573, 1
        %v578 = vsel %vm574, %v568, 0.0
        %v579 = vsel %vm575, %v567, 0.0
        %v580 = vsel %vm576, %v566, 0.0
        %v581 = vsel %vm577, %v569, 0.0
        %v582 = vld [vmem:[#allocation7] sm:$0xff]
        %v583 = vld [vmem:[#allocation7 + $0x8] sm:$0xff]
        %v584 = vld [vmem:[#allocation7 + $0x10] sm:$0xff]
        %v585 = vld [vmem:[#allocation7 + $0x18] sm:$0xff]
        %v586 = vld [vmem:[#allocation7 + $0x20] sm:$0xff]
        %v587 = vld [vmem:[#allocation7 + $0x28] sm:$0xff]
        %v588 = vld [vmem:[#allocation7 + $0x30] sm:$0xff]
        %v589 = vld [vmem:[#allocation7 + $0x38] sm:$0xff]
        %v590 = vld [vmem:[#allocation7 + $0x40] sm:$0xff]
        %v591 = vld [vmem:[#allocation7 + $0x48] sm:$0xff]
        %v592 = vld [vmem:[#allocation7 + $0x50] sm:$0xff]
        %v593 = vld [vmem:[#allocation7 + $0x58] sm:$0xff]
        %v594 = vld [vmem:[#allocation7 + $0x60] sm:$0xff]
        %v595 = vld [vmem:[#allocation7 + $0x68] sm:$0xff]
        %v596 = vld [vmem:[#allocation7 + $0x70] sm:$0xff]
        %v597 = vld [vmem:[#allocation7 + $0x78] sm:$0xff]
        %v598 = vld [vmem:[#allocation7 + $0x80] sm:$0xff]
        %v599 = vld [vmem:[#allocation7 + $0x88] sm:$0xff]
        %v600 = vld [vmem:[#allocation7 + $0x90] sm:$0xff]
        %v601 = vld [vmem:[#allocation7 + $0x98] sm:$0xff]
        %v602 = vld [vmem:[#allocation7 + $0xa0] sm:$0xff]
        %v603 = vld [vmem:[#allocation7 + $0xa8] sm:$0xff]
        %v604 = vld [vmem:[#allocation7 + $0xb0] sm:$0xff]
        %v605 = vld [vmem:[#allocation7 + $0xb8] sm:$0xff]
        %v606 = vld [vmem:[#allocation7 + $0xc0] sm:$0xff]
        %v607 = vld [vmem:[#allocation7 + $0xc8] sm:$0xff]
        %v608 = vld [vmem:[#allocation7 + $0xd0] sm:$0xff]
        %v609 = vld [vmem:[#allocation7 + $0xd8] sm:$0xff]
        %v610 = vld [vmem:[#allocation7 + $0xe0] sm:$0xff]
        %v611 = vld [vmem:[#allocation7 + $0xe8] sm:$0xff]
        %v612 = vld [vmem:[#allocation7 + $0xf0] sm:$0xff]
        %v613 = vld [vmem:[#allocation7 + $0xf8] sm:$0xff]
        %v614 = vld [vmem:[#allocation7 + $0x100] sm:$0xff]
        %v615 = vld [vmem:[#allocation7 + $0x108] sm:$0xff]
        %v616 = vld [vmem:[#allocation7 + $0x110] sm:$0xff]
        %v617 = vld [vmem:[#allocation7 + $0x118] sm:$0xff]
        %v618 = vld [vmem:[#allocation7 + $0x120] sm:$0xff]
        %v619 = vld [vmem:[#allocation7 + $0x128] sm:$0xff]
        %v620 = vld [vmem:[#allocation7 + $0x130] sm:$0xff]
        %v621 = vld [vmem:[#allocation7 + $0x138] sm:$0xff]
        %v622 = vld [vmem:[#allocation7 + $0x140] sm:$0xff]
        %v623 = vld [vmem:[#allocation7 + $0x148] sm:$0xff]
        %v624 = vld [vmem:[#allocation7 + $0x150] sm:$0xff]
        %v625 = vld [vmem:[#allocation7 + $0x158] sm:$0xff]
        %v626 = vld [vmem:[#allocation7 + $0x160] sm:$0xff]
        %v627 = vld [vmem:[#allocation7 + $0x168] sm:$0xff]
        %v628 = vld [vmem:[#allocation7 + $0x170] sm:$0xff]
        %v629 = vld [vmem:[#allocation7 + $0x178] sm:$0xff]
        %v630 = vld [vmem:[%s5] sm:$0x1]
        %v632 = vlaneseq
        %v633 = vshrl.u32 %v632, 7
        %v634 = vsub.s32 0, %v633
        %v635 = vrot.slane %v630, %v634
        %637 = vmatprep.subr.mxu0 0.0
        %638 = vmatpush1.msra.mxu0 %v582
        %639 = vmatprep.subr.mxu0 0.0
        %640 = vmatpush1.msra.mxu0 %v583
        %641 = vmatprep.subr.mxu0 0.0
        %642 = vmatpush1.msra.mxu0 %v584
        %643 = vmatprep.subr.mxu0 0.0
        %644 = vmatpush1.msra.mxu0 %v585
        %645 = vmatprep.subr.mxu0 0.0
        %646 = vmatpush1.msra.mxu0 %v586
        %647 = vmatprep.subr.mxu0 0.0
        %648 = vmatpush1.msra.mxu0 %v587
        %649 = vmatprep.subr.mxu0 0.0
        %650 = vmatpush1.msra.mxu0 %v588
        %651 = vmatprep.subr.mxu0 0.0
        %652 = vmatpush1.msra.mxu0 %v589
        %653 = vmatprep.subr.mxu0 0.0
        %654 = vmatpush1.msra.mxu0 %v590
        %655 = vmatprep.subr.mxu0 0.0
        %656 = vmatpush1.msra.mxu0 %v591
        %657 = vmatprep.subr.mxu0 0.0
        %658 = vmatpush1.msra.mxu0 %v592
        %659 = vmatprep.subr.mxu0 0.0
        %660 = vmatpush1.msra.mxu0 %v593
        %661 = vmatprep.subr.mxu0 0.0
        %662 = vmatpush1.msra.mxu0 %v594
        %663 = vmatprep.subr.mxu0 0.0
        %664 = vmatpush1.msra.mxu0 %v595
        %665 = vmatprep.subr.mxu0 0.0
        %666 = vmatpush1.msra.mxu0 %v596
        %667 = vmatprep.subr.mxu0 0.0
        %668 = vmatpush1.msra.mxu0 %v597
        %669 = vmatprep.subr.mxu0 0.0
        %670 = vmatpush1.msra.mxu0 %v598
        %671 = vmatprep.subr.mxu0 0.0
        %672 = vmatpush1.msra.mxu0 %v599
        %673 = vmatprep.subr.mxu0 0.0
        %674 = vmatpush1.msra.mxu0 %v600
        %675 = vmatprep.subr.mxu0 0.0
        %676 = vmatpush1.msra.mxu0 %v601
        %677 = vmatprep.subr.mxu0 0.0
        %678 = vmatpush1.msra.mxu0 %v602
        %679 = vmatprep.subr.mxu0 0.0
        %680 = vmatpush1.msra.mxu0 %v603
        %681 = vmatprep.subr.mxu0 0.0
        %682 = vmatpush1.msra.mxu0 %v604
        %683 = vmatprep.subr.mxu0 0.0
        %684 = vmatpush1.msra.mxu0 %v605
        %685 = vmatprep.subr.mxu0 0.0
        %686 = vmatpush1.msra.mxu0 %v606
        %687 = vmatprep.subr.mxu0 0.0
        %688 = vmatpush1.msra.mxu0 %v607
        %689 = vmatprep.subr.mxu0 0.0
        %690 = vmatpush1.msra.mxu0 %v608
        %691 = vmatprep.subr.mxu0 0.0
        %692 = vmatpush1.msra.mxu0 %v609
        %693 = vmatprep.subr.mxu0 0.0
        %694 = vmatpush1.msra.mxu0 %v610
        %695 = vmatprep.subr.mxu0 0.0
        %696 = vmatpush1.msra.mxu0 %v611
        %697 = vmatprep.subr.mxu0 0.0
        %698 = vmatpush1.msra.mxu0 %v612
        %699 = vmatprep.subr.mxu0 0.0
        %700 = vmatpush1.msra.mxu0 %v613
        %701 = vmatprep.mubr.f32.mxu0 %v437
        %702 = vmatmul.mubr.f32.gmra.mrb[0].mxu0 %v557
        %v703 = vpop.f32.mrb[0].mxu0
        %v704 = vadd.f32 %v635, %v703
        %v705 = vpop.f32.mrb[0].mxu0
        %706 = vmatprep.mubr.f32.mxu0 %v442
        %707 = vmatmul.mubr.f32.gmra.mrb[0].mxu0 %v558
        %v708 = vpop.f32.mrb[0].mxu0
        %v709 = vadd.f32 %v635, %v708
        %v710 = vpop.f32.mrb[0].mxu0
        %711 = vmatprep.mubr.f32.mxu0 %v447
        %712 = vmatmul.mubr.f32.gmra.mrb[0].mxu0 %v559
        %v713 = vpop.f32.mrb[0].mxu0
        %v714 = vadd.f32 %v635, %v713
        %v715 = vpop.f32.mrb[0].mxu0
        %716 = vmatprep.mubr.f32.mxu0 %v452
        %717 = vmatmul.mubr.f32.gmra.mrb[0].mxu0 %v560
        %v718 = vpop.f32.mrb[0].mxu0
        %v719 = vadd.f32 %v635, %v718
        %v720 = vpop.f32.mrb[0].mxu0
        %721 = vdwg.mxu0
        %722 = vmatprep.subr.mxu0 0.0
        %723 = vmatpush1.msra.mxu0 %v614
        %724 = vmatprep.subr.mxu0 0.0
        %725 = vmatpush1.msra.mxu0 %v615
        %726 = vmatprep.subr.mxu0 0.0
        %727 = vmatpush1.msra.mxu0 %v616
        %728 = vmatprep.subr.mxu0 0.0
        %729 = vmatpush1.msra.mxu0 %v617
        %730 = vmatprep.subr.mxu0 0.0
        %731 = vmatpush1.msra.mxu0 %v618
        %732 = vmatprep.subr.mxu0 0.0
        %733 = vmatpush1.msra.mxu0 %v619
        %734 = vmatprep.subr.mxu0 0.0
        %735 = vmatpush1.msra.mxu0 %v620
        %736 = vmatprep.subr.mxu0 0.0
        %737 = vmatpush1.msra.mxu0 %v621
        %738 = vmatprep.subr.mxu0 0.0
        %739 = vmatpush1.msra.mxu0 %v622
        %740 = vmatprep.subr.mxu0 0.0
        %741 = vmatpush1.msra.mxu0 %v623
        %742 = vmatprep.subr.mxu0 0.0
        %743 = vmatpush1.msra.mxu0 %v624
        %744 = vmatprep.subr.mxu0 0.0
        %745 = vmatpush1.msra.mxu0 %v625
        %746 = vmatprep.subr.mxu0 0.0
        %747 = vmatpush1.msra.mxu0 %v626
        %748 = vmatprep.subr.mxu0 0.0
        %749 = vmatpush1.msra.mxu0 %v627
        %750 = vmatprep.subr.mxu0 0.0
        %751 = vmatpush1.msra.mxu0 %v628
        %752 = vmatprep.subr.mxu0 0.0
        %753 = vmatpush1.msra.mxu0 %v629
        %754 = vmatprep.subr.mxu0 0.0
        %755 = vmatpush1.msra.mxu0 0.0
        %756 = vmatprep.subr.mxu0 0.0
        %757 = vmatpush1.msra.mxu0 0.0
        %758 = vmatprep.subr.mxu0 0.0
        %759 = vmatpush1.msra.mxu0 0.0
        %760 = vmatprep.subr.mxu0 0.0
        %761 = vmatpush1.msra.mxu0 0.0
        %762 = vmatprep.subr.mxu0 0.0
        %763 = vmatpush1.msra.mxu0 0.0
        %764 = vmatprep.subr.mxu0 0.0
        %765 = vmatpush1.msra.mxu0 0.0
        %766 = vmatprep.subr.mxu0 0.0
        %767 = vmatpush1.msra.mxu0 0.0
        %768 = vmatprep.subr.mxu0 0.0
        %769 = vmatpush1.msra.mxu0 0.0
        %770 = vmatprep.subr.mxu0 0.0
        %771 = vmatpush1.msra.mxu0 0.0
        %772 = vmatprep.subr.mxu0 0.0
        %773 = vmatpush1.msra.mxu0 0.0
        %774 = vmatprep.subr.mxu0 0.0
        %775 = vmatpush1.msra.mxu0 0.0
        %776 = vmatprep.subr.mxu0 0.0
        %777 = vmatpush1.msra.mxu0 0.0
        %778 = vmatprep.subr.mxu0 0.0
        %779 = vmatpush1.msra.mxu0 0.0
        %780 = vmatprep.subr.mxu0 0.0
        %781 = vmatpush1.msra.mxu0 0.0
        %782 = vmatprep.subr.mxu0 0.0
        %783 = vmatpush1.msra.mxu0 0.0
        %784 = vmatprep.subr.mxu0 0.0
        %785 = vmatpush1.msra.mxu0 0.0
        %786 = vmatprep.mubr.f32.mxu0 0.0
        %787 = vmatmul.mubr.f32.gmra.mrb[0].mxu0 %v578
        %v788 = vpop.f32.mrb[0].mxu0
        %v789 = vadd.f32 %v704, %v788
        %v790 = vpop.f32.mrb[0].mxu0
        %791 = vmatprep.mubr.f32.mxu0 0.0
        %792 = vmatmul.mubr.f32.gmra.mrb[0].mxu0 %v579
        %v793 = vpop.f32.mrb[0].mxu0
        %v794 = vadd.f32 %v709, %v793
        %v795 = vpop.f32.mrb[0].mxu0
        %796 = vmatprep.mubr.f32.mxu0 0.0
        %797 = vmatmul.mubr.f32.gmra.mrb[0].mxu0 %v580
        %v798 = vpop.f32.mrb[0].mxu0
        %v799 = vadd.f32 %v714, %v798
        %v800 = vpop.f32.mrb[0].mxu0
        %801 = vmatprep.mubr.f32.mxu0 0.0
        %802 = vmatmul.mubr.f32.gmra.mrb[0].mxu0 %v581
        %v803 = vpop.f32.mrb[0].mxu0
        %v804 = vadd.f32 %v719, %v803
        %v805 = vpop.f32.mrb[0].mxu0
        %806 = vdwg.mxu0
        %v807 = vld [vmem:[#allocation8] sm:$0xff]
        %v808 = vld [vmem:[#allocation8 + $0x8] sm:$0xff]
        %v809 = vld [vmem:[#allocation8 + $0x10] sm:$0xff]
        %v810 = vld [vmem:[#allocation8 + $0x18] sm:$0xff]
        %v811 = vld [vmem:[#allocation8 + $0x20] sm:$0xff]
        %v812 = vld [vmem:[#allocation8 + $0x28] sm:$0xff]
        %v813 = vld [vmem:[#allocation8 + $0x30] sm:$0xff]
        %v814 = vld [vmem:[#allocation8 + $0x38] sm:$0xff]
        %v815 = vld [vmem:[#allocation8 + $0x40] sm:$0xff]
        %v816 = vld [vmem:[#allocation8 + $0x48] sm:$0xff]
        %v817 = vld [vmem:[#allocation8 + $0x50] sm:$0xff]
        %v818 = vld [vmem:[#allocation8 + $0x58] sm:$0xff]
        %v819 = vld [vmem:[#allocation8 + $0x60] sm:$0xff]
        %v820 = vld [vmem:[#allocation8 + $0x68] sm:$0xff]
        %v821 = vld [vmem:[#allocation8 + $0x70] sm:$0xff]
        %v822 = vld [vmem:[#allocation8 + $0x78] sm:$0xff]
        %v823 = vld [vmem:[#allocation8 + $0x80] sm:$0xff]
        %v824 = vld [vmem:[#allocation8 + $0x88] sm:$0xff]
        %v825 = vld [vmem:[#allocation8 + $0x90] sm:$0xff]
        %v826 = vld [vmem:[#allocation8 + $0x98] sm:$0xff]
        %v827 = vld [vmem:[#allocation8 + $0xa0] sm:$0xff]
        %v828 = vld [vmem:[#allocation8 + $0xa8] sm:$0xff]
        %v829 = vld [vmem:[#allocation8 + $0xb0] sm:$0xff]
        %v830 = vld [vmem:[#allocation8 + $0xb8] sm:$0xff]
        %v831 = vld [vmem:[#allocation8 + $0xc0] sm:$0xff]
        %v832 = vld [vmem:[#allocation8 + $0xc8] sm:$0xff]
        %v833 = vld [vmem:[#allocation8 + $0xd0] sm:$0xff]
        %v834 = vld [vmem:[#allocation8 + $0xd8] sm:$0xff]
        %v835 = vld [vmem:[#allocation8 + $0xe0] sm:$0xff]
        %v836 = vld [vmem:[#allocation8 + $0xe8] sm:$0xff]
        %v837 = vld [vmem:[#allocation8 + $0xf0] sm:$0xff]
        %v838 = vld [vmem:[#allocation8 + $0xf8] sm:$0xff]
        %v839 = vld [vmem:[#allocation8 + $0x100] sm:$0xff]
        %v840 = vld [vmem:[#allocation8 + $0x108] sm:$0xff]
        %v841 = vld [vmem:[#allocation8 + $0x110] sm:$0xff]
        %v842 = vld [vmem:[#allocation8 + $0x118] sm:$0xff]
        %v843 = vld [vmem:[#allocation8 + $0x120] sm:$0xff]
        %v844 = vld [vmem:[#allocation8 + $0x128] sm:$0xff]
        %v845 = vld [vmem:[#allocation8 + $0x130] sm:$0xff]
        %v846 = vld [vmem:[#allocation8 + $0x138] sm:$0xff]
        %v847 = vld [vmem:[#allocation8 + $0x140] sm:$0xff]
        %v848 = vld [vmem:[#allocation8 + $0x148] sm:$0xff]
        %v849 = vld [vmem:[#allocation8 + $0x150] sm:$0xff]
        %v850 = vld [vmem:[#allocation8 + $0x158] sm:$0xff]
        %v851 = vld [vmem:[#allocation8 + $0x160] sm:$0xff]
        %v852 = vld [vmem:[#allocation8 + $0x168] sm:$0xff]
        %v853 = vld [vmem:[#allocation8 + $0x170] sm:$0xff]
        %v854 = vld [vmem:[#allocation8 + $0x178] sm:$0xff]
        %v855 = vld [vmem:[%s6] sm:$0x1]
        %v857 = vlaneseq
        %v858 = vshrl.u32 %v857, 7
        %v859 = vsub.s32 0, %v858
        %v860 = vrot.slane %v855, %v859
        %862 = vmatprep.subr.mxu0 0.0
        %863 = vmatpush1.msra.mxu0 %v807
        %864 = vmatprep.subr.mxu0 0.0
        %865 = vmatpush1.msra.mxu0 %v808
        %866 = vmatprep.subr.mxu0 0.0
        %867 = vmatpush1.msra.mxu0 %v809
        %868 = vmatprep.subr.mxu0 0.0
        %869 = vmatpush1.msra.mxu0 %v810
        %870 = vmatprep.subr.mxu0 0.0
        %871 = vmatpush1.msra.mxu0 %v811
        %872 = vmatprep.subr.mxu0 0.0
        %873 = vmatpush1.msra.mxu0 %v812
        %874 = vmatprep.subr.mxu0 0.0
        %875 = vmatpush1.msra.mxu0 %v813
        %876 = vmatprep.subr.mxu0 0.0
        %877 = vmatpush1.msra.mxu0 %v814
        %878 = vmatprep.subr.mxu0 0.0
        %879 = vmatpush1.msra.mxu0 %v815
        %880 = vmatprep.subr.mxu0 0.0
        %881 = vmatpush1.msra.mxu0 %v816
        %882 = vmatprep.subr.mxu0 0.0
        %883 = vmatpush1.msra.mxu0 %v817
        %884 = vmatprep.subr.mxu0 0.0
        %885 = vmatpush1.msra.mxu0 %v818
        %886 = vmatprep.subr.mxu0 0.0
        %887 = vmatpush1.msra.mxu0 %v819
        %888 = vmatprep.subr.mxu0 0.0
        %889 = vmatpush1.msra.mxu0 %v820
        %890 = vmatprep.subr.mxu0 0.0
        %891 = vmatpush1.msra.mxu0 %v821
        %892 = vmatprep.subr.mxu0 0.0
        %893 = vmatpush1.msra.mxu0 %v822
        %894 = vmatprep.subr.mxu0 0.0
        %895 = vmatpush1.msra.mxu0 %v823
        %896 = vmatprep.subr.mxu0 0.0
        %897 = vmatpush1.msra.mxu0 %v824
        %898 = vmatprep.subr.mxu0 0.0
        %899 = vmatpush1.msra.mxu0 %v825
        %900 = vmatprep.subr.mxu0 0.0
        %901 = vmatpush1.msra.mxu0 %v826
        %902 = vmatprep.subr.mxu0 0.0
        %903 = vmatpush1.msra.mxu0 %v827
        %904 = vmatprep.subr.mxu0 0.0
        %905 = vmatpush1.msra.mxu0 %v828
        %906 = vmatprep.subr.mxu0 0.0
        %907 = vmatpush1.msra.mxu0 %v829
        %908 = vmatprep.subr.mxu0 0.0
        %909 = vmatpush1.msra.mxu0 %v830
        %910 = vmatprep.subr.mxu0 0.0
        %911 = vmatpush1.msra.mxu0 %v831
        %912 = vmatprep.subr.mxu0 0.0
        %913 = vmatpush1.msra.mxu0 %v832
        %914 = vmatprep.subr.mxu0 0.0
        %915 = vmatpush1.msra.mxu0 %v833
        %916 = vmatprep.subr.mxu0 0.0
        %917 = vmatpush1.msra.mxu0 %v834
        %918 = vmatprep.subr.mxu0 0.0
        %919 = vmatpush1.msra.mxu0 %v835
        %920 = vmatprep.subr.mxu0 0.0
        %921 = vmatpush1.msra.mxu0 %v836
        %922 = vmatprep.subr.mxu0 0.0
        %923 = vmatpush1.msra.mxu0 %v837
        %924 = vmatprep.subr.mxu0 0.0
        %925 = vmatpush1.msra.mxu0 %v838
        %926 = vmatprep.mubr.f32.mxu0 %v437
        %927 = vmatmul.mubr.f32.gmra.mrb[0].mxu0 %v557
        %v928 = vpop.f32.mrb[0].mxu0
        %v929 = vadd.f32 %v860, %v928
        %v930 = vpop.f32.mrb[0].mxu0
        %931 = vmatprep.mubr.f32.mxu0 %v442
        %932 = vmatmul.mubr.f32.gmra.mrb[0].mxu0 %v558
        %v933 = vpop.f32.mrb[0].mxu0
        %v934 = vadd.f32 %v860, %v933
        %v935 = vpop.f32.mrb[0].mxu0
        %936 = vmatprep.mubr.f32.mxu0 %v447
        %937 = vmatmul.mubr.f32.gmra.mrb[0].mxu0 %v559
        %v938 = vpop.f32.mrb[0].mxu0
        %v939 = vadd.f32 %v860, %v938
        %v940 = vpop.f32.mrb[0].mxu0
        %941 = vmatprep.mubr.f32.mxu0 %v452
        %942 = vmatmul.mubr.f32.gmra.mrb[0].mxu0 %v560
        %v943 = vpop.f32.mrb[0].mxu0
        %v944 = vadd.f32 %v860, %v943
        %v945 = vpop.f32.mrb[0].mxu0
        %946 = vdwg.mxu0
        %947 = vmatprep.subr.mxu0 0.0
        %948 = vmatpush1.msra.mxu0 %v839
        %949 = vmatprep.subr.mxu0 0.0
        %950 = vmatpush1.msra.mxu0 %v840
        %951 = vmatprep.subr.mxu0 0.0
        %952 = vmatpush1.msra.mxu0 %v841
        %953 = vmatprep.subr.mxu0 0.0
        %954 = vmatpush1.msra.mxu0 %v842
        %955 = vmatprep.subr.mxu0 0.0
        %956 = vmatpush1.msra.mxu0 %v843
        %957 = vmatprep.subr.mxu0 0.0
        %958 = vmatpush1.msra.mxu0 %v844
        %959 = vmatprep.subr.mxu0 0.0
        %960 = vmatpush1.msra.mxu0 %v845
        %961 = vmatprep.subr.mxu0 0.0
        %962 = vmatpush1.msra.mxu0 %v846
        %963 = vmatprep.subr.mxu0 0.0
        %964 = vmatpush1.msra.mxu0 %v847
        %965 = vmatprep.subr.mxu0 0.0
        %966 = vmatpush1.msra.mxu0 %v848
        %967 = vmatprep.subr.mxu0 0.0
        %968 = vmatpush1.msra.mxu0 %v849
        %969 = vmatprep.subr.mxu0 0.0
        %970 = vmatpush1.msra.mxu0 %v850
        %971 = vmatprep.subr.mxu0 0.0
        %972 = vmatpush1.msra.mxu0 %v851
        %973 = vmatprep.subr.mxu0 0.0
        %974 = vmatpush1.msra.mxu0 %v852
        %975 = vmatprep.subr.mxu0 0.0
        %976 = vmatpush1.msra.mxu0 %v853
        %977 = vmatprep.subr.mxu0 0.0
        %978 = vmatpush1.msra.mxu0 %v854
        %979 = vmatprep.subr.mxu0 0.0
        %980 = vmatpush1.msra.mxu0 0.0
        %981 = vmatprep.subr.mxu0 0.0
        %982 = vmatpush1.msra.mxu0 0.0
        %983 = vmatprep.subr.mxu0 0.0
        %984 = vmatpush1.msra.mxu0 0.0
        %985 = vmatprep.subr.mxu0 0.0
        %986 = vmatpush1.msra.mxu0 0.0
        %987 = vmatprep.subr.mxu0 0.0
        %988 = vmatpush1.msra.mxu0 0.0
        %989 = vmatprep.subr.mxu0 0.0
        %990 = vmatpush1.msra.mxu0 0.0
        %991 = vmatprep.subr.mxu0 0.0
        %992 = vmatpush1.msra.mxu0 0.0
        %993 = vmatprep.subr.mxu0 0.0
        %994 = vmatpush1.msra.mxu0 0.0
        %995 = vmatprep.subr.mxu0 0.0
        %996 = vmatpush1.msra.mxu0 0.0
        %997 = vmatprep.subr.mxu0 0.0
        %998 = vmatpush1.msra.mxu0 0.0
        %999 = vmatprep.subr.mxu0 0.0
        %1000 = vmatpush1.msra.mxu0 0.0
        %1001 = vmatprep.subr.mxu0 0.0
        %1002 = vmatpush1.msra.mxu0 0.0
        %1003 = vmatprep.subr.mxu0 0.0
        %1004 = vmatpush1.msra.mxu0 0.0
        %1005 = vmatprep.subr.mxu0 0.0
        %1006 = vmatpush1.msra.mxu0 0.0
        %1007 = vmatprep.subr.mxu0 0.0
        %1008 = vmatpush1.msra.mxu0 0.0
        %1009 = vmatprep.subr.mxu0 0.0
        %1010 = vmatpush1.msra.mxu0 0.0
        %1011 = vmatprep.mubr.f32.mxu0 0.0
        %1012 = vmatmul.mubr.f32.gmra.mrb[0].mxu0 %v578
        %v1013 = vpop.f32.mrb[0].mxu0
        %v1014 = vadd.f32 %v929, %v1013
        %v1015 = vpop.f32.mrb[0].mxu0
        %1016 = vmatprep.mubr.f32.mxu0 0.0
        %1017 = vmatmul.mubr.f32.gmra.mrb[0].mxu0 %v579
        %v1018 = vpop.f32.mrb[0].mxu0
        %v1019 = vadd.f32 %v934, %v1018
        %v1020 = vpop.f32.mrb[0].mxu0
        %1021 = vmatprep.mubr.f32.mxu0 0.0
        %1022 = vmatmul.mubr.f32.gmra.mrb[0].mxu0 %v580
        %v1023 = vpop.f32.mrb[0].mxu0
        %v1024 = vadd.f32 %v939, %v1023
        %v1025 = vpop.f32.mrb[0].mxu0
        %1026 = vmatprep.mubr.f32.mxu0 0.0
        %1027 = vmatmul.mubr.f32.gmra.mrb[0].mxu0 %v581
        %v1028 = vpop.f32.mrb[0].mxu0
        %v1029 = vadd.f32 %v944, %v1028
        %v1030 = vpop.f32.mrb[0].mxu0
        %1031 = vdwg.mxu0
        %v1032 = vxor.u32 %v1014, 2147483648
        %v1033 = vxor.u32 %v1019, 2147483648
        %v1034 = vxor.u32 %v1024, 2147483648
        %v1035 = vxor.u32 %v1029, 2147483648
        %v1036 = vmul.f32 %v1032, 1.442695
        %v1037 = vpow.pop %v1036
        %v1038 = vmul.f32 %v1033, 1.442695
        %v1039 = vpow.pop %v1038
        %v1040 = vmul.f32 %v1034, 1.442695
        %v1041 = vpow.pop %v1040
        %v1042 = vmul.f32 %v1035, 1.442695
        %v1043 = vpow.pop %v1042
        %v1044 = vadd.f32 %v1037, 1.0
        %v1045 = vadd.f32 %v1039, 1.0
        %v1046 = vadd.f32 %v1041, 1.0
        %v1047 = vadd.f32 %v1043, 1.0
        %v1048 = vrcp.pop %v1044
        %v1049 = vmul.f32 1.0, %v1048
        %v1050 = vrcp.pop %v1045
        %v1051 = vmul.f32 1.0, %v1050
        %v1052 = vrcp.pop %v1046
        %v1053 = vmul.f32 1.0, %v1052
        %v1054 = vrcp.pop %v1047
        %v1055 = vmul.f32 1.0, %v1054
        %v1056 = vmul.f32 %v789, %v1049
        %v1057 = vmul.f32 %v794, %v1051
        %v1058 = vmul.f32 %v799, %v1053
        %v1059 = vmul.f32 %v804, %v1055
        %v1060 = vadd.f32 %v1056, %v437
        %v1061 = vadd.f32 %v1057, %v442
        %v1062 = vadd.f32 %v1058, %v447
        %v1063 = vadd.f32 %v1059, %v452
        %v1064 = vmul.f32 %v1060, 0.70710677
        %v1065 = vmul.f32 %v1061, 0.70710677
        %v1066 = vmul.f32 %v1062, 0.70710677
        %v1067 = vmul.f32 %v1063, 0.70710677
        %v1068 = vrot.slane %v1064, 7
        %v1069 = vrot.slane %v1065, 7
        %v1070 = vrot.slane %v1066, 7
        %v1071 = vrot.slane %v1067, 7
        %v1072 = vsel %vm544, %v1070, %v1071
        %v1073 = vsel %vm544, %v1069, %v1070
        %v1074 = vsel %vm544, %v1068, %v1069
        %v1075 = vsel %vm544, %v1071, %v1068
        %v1076 = vsel %vm553, %v1075, 0.0
        %v1077 = vsel %vm554, %v1074, 0.0
        %v1078 = vsel %vm555, %v1073, 0.0
        %v1079 = vsel %vm556, %v1072, 0.0
        %v1080 = vrot.slane %v1064, 1
        %v1081 = vrot.slane %v1065, 1
        %v1082 = vrot.slane %v1066, 1
        %v1083 = vrot.slane %v1067, 1
        %v1084 = vsel %vm565, %v1082, %v1083
        %v1085 = vsel %vm565, %v1081, %v1082
        %v1086 = vsel %vm565, %v1080, %v1081
        %v1087 = vsel %vm565, %v1083, %v1080
        %v1088 = vsel %vm574, %v1086, 0.0
        %v1089 = vsel %vm575, %v1085, 0.0
        %v1090 = vsel %vm576, %v1084, 0.0
        %v1091 = vsel %vm577, %v1087, 0.0
        %s1092 = scalar_lea.vmem [#allocation7], 384
        %v1093 = vld [vmem:[%s1092] sm:$0xff]
        %v1094 = vld [vmem:[%s1092 + $0x8] sm:$0xff]
        %v1095 = vld [vmem:[%s1092 + $0x10] sm:$0xff]
        %v1096 = vld [vmem:[%s1092 + $0x18] sm:$0xff]
        %v1097 = vld [vmem:[%s1092 + $0x20] sm:$0xff]
        %v1098 = vld [vmem:[%s1092 + $0x28] sm:$0xff]
        %v1099 = vld [vmem:[%s1092 + $0x30] sm:$0xff]
        %v1100 = vld [vmem:[%s1092 + $0x38] sm:$0xff]
        %v1101 = vld [vmem:[%s1092 + $0x40] sm:$0xff]
        %v1102 = vld [vmem:[%s1092 + $0x48] sm:$0xff]
        %v1103 = vld [vmem:[%s1092 + $0x50] sm:$0xff]
        %v1104 = vld [vmem:[%s1092 + $0x58] sm:$0xff]
        %v1105 = vld [vmem:[%s1092 + $0x60] sm:$0xff]
        %v1106 = vld [vmem:[%s1092 + $0x68] sm:$0xff]
        %v1107 = vld [vmem:[%s1092 + $0x70] sm:$0xff]
        %v1108 = vld [vmem:[%s1092 + $0x78] sm:$0xff]
        %v1109 = vld [vmem:[%s1092 + $0x80] sm:$0xff]
        %v1110 = vld [vmem:[%s1092 + $0x88] sm:$0xff]
        %v1111 = vld [vmem:[%s1092 + $0x90] sm:$0xff]
        %v1112 = vld [vmem:[%s1092 + $0x98] sm:$0xff]
        %v1113 = vld [vmem:[%s1092 + $0xa0] sm:$0xff]
        %v1114 = vld [vmem:[%s1092 + $0xa8] sm:$0xff]
        %v1115 = vld [vmem:[%s1092 + $0xb0] sm:$0xff]
        %v1116 = vld [vmem:[%s1092 + $0xb8] sm:$0xff]
        %v1117 = vld [vmem:[%s1092 + $0xc0] sm:$0xff]
        %v1118 = vld [vmem:[%s1092 + $0xc8] sm:$0xff]
        %v1119 = vld [vmem:[%s1092 + $0xd0] sm:$0xff]
        %v1120 = vld [vmem:[%s1092 + $0xd8] sm:$0xff]
        %v1121 = vld [vmem:[%s1092 + $0xe0] sm:$0xff]
        %v1122 = vld [vmem:[%s1092 + $0xe8] sm:$0xff]
        %v1123 = vld [vmem:[%s1092 + $0xf0] sm:$0xff]
        %v1124 = vld [vmem:[%s1092 + $0xf8] sm:$0xff]
        %v1125 = vld [vmem:[%s1092 + $0x100] sm:$0xff]
        %v1126 = vld [vmem:[%s1092 + $0x108] sm:$0xff]
        %v1127 = vld [vmem:[%s1092 + $0x110] sm:$0xff]
        %v1128 = vld [vmem:[%s1092 + $0x118] sm:$0xff]
        %v1129 = vld [vmem:[%s1092 + $0x120] sm:$0xff]
        %v1130 = vld [vmem:[%s1092 + $0x128] sm:$0xff]
        %v1131 = vld [vmem:[%s1092 + $0x130] sm:$0xff]
        %v1132 = vld [vmem:[%s1092 + $0x138] sm:$0xff]
        %v1133 = vld [vmem:[%s1092 + $0x140] sm:$0xff]
        %v1134 = vld [vmem:[%s1092 + $0x148] sm:$0xff]
        %v1135 = vld [vmem:[%s1092 + $0x150] sm:$0xff]
        %v1136 = vld [vmem:[%s1092 + $0x158] sm:$0xff]
        %v1137 = vld [vmem:[%s1092 + $0x160] sm:$0xff]
        %v1138 = vld [vmem:[%s1092 + $0x168] sm:$0xff]
        %v1139 = vld [vmem:[%s1092 + $0x170] sm:$0xff]
        %v1140 = vld [vmem:[%s1092 + $0x178] sm:$0xff]
        %s1141 = scalar_lea.vmem %s5, 1
        %v1142 = vld [vmem:[%s1141] sm:$0x1]
        %v1144 = vlaneseq
        %v1145 = vshrl.u32 %v1144, 7
        %v1146 = vsub.s32 0, %v1145
        %v1147 = vrot.slane %v1142, %v1146
        %1149 = vmatprep.subr.mxu0 0.0
        %1150 = vmatpush1.msra.mxu0 %v1093
        %1151 = vmatprep.subr.mxu0 0.0
        %1152 = vmatpush1.msra.mxu0 %v1094
        %1153 = vmatprep.subr.mxu0 0.0
        %1154 = vmatpush1.msra.mxu0 %v1095
        %1155 = vmatprep.subr.mxu0 0.0
        %1156 = vmatpush1.msra.mxu0 %v1096
        %1157 = vmatprep.subr.mxu0 0.0
        %1158 = vmatpush1.msra.mxu0 %v1097
        %1159 = vmatprep.subr.mxu0 0.0
        %1160 = vmatpush1.msra.mxu0 %v1098
        %1161 = vmatprep.subr.mxu0 0.0
        %1162 = vmatpush1.msra.mxu0 %v1099
        %1163 = vmatprep.subr.mxu0 0.0
        %1164 = vmatpush1.msra.mxu0 %v1100
        %1165 = vmatprep.subr.mxu0 0.0
        %1166 = vmatpush1.msra.mxu0 %v1101
        %1167 = vmatprep.subr.mxu0 0.0
        %1168 = vmatpush1.msra.mxu0 %v1102
        %1169 = vmatprep.subr.mxu0 0.0
        %1170 = vmatpush1.msra.mxu0 %v1103
        %1171 = vmatprep.subr.mxu0 0.0
        %1172 = vmatpush1.msra.mxu0 %v1104
        %1173 = vmatprep.subr.mxu0 0.0
        %1174 = vmatpush1.msra.mxu0 %v1105
        %1175 = vmatprep.subr.mxu0 0.0
        %1176 = vmatpush1.msra.mxu0 %v1106
        %1177 = vmatprep.subr.mxu0 0.0
        %1178 = vmatpush1.msra.mxu0 %v1107
        %1179 = vmatprep.subr.mxu0 0.0
        %1180 = vmatpush1.msra.mxu0 %v1108
        %1181 = vmatprep.subr.mxu0 0.0
        %1182 = vmatpush1.msra.mxu0 %v1109
        %1183 = vmatprep.subr.mxu0 0.0
        %1184 = vmatpush1.msra.mxu0 %v1110
        %1185 = vmatprep.subr.mxu0 0.0
        %1186 = vmatpush1.msra.mxu0 %v1111
        %1187 = vmatprep.subr.mxu0 0.0
        %1188 = vmatpush1.msra.mxu0 %v1112
        %1189 = vmatprep.subr.mxu0 0.0
        %1190 = vmatpush1.msra.mxu0 %v1113
        %1191 = vmatprep.subr.mxu0 0.0
        %1192 = vmatpush1.msra.mxu0 %v1114
        %1193 = vmatprep.subr.mxu0 0.0
        %1194 = vmatpush1.msra.mxu0 %v1115
        %1195 = vmatprep.subr.mxu0 0.0
        %1196 = vmatpush1.msra.mxu0 %v1116
        %1197 = vmatprep.subr.mxu0 0.0
        %1198 = vmatpush1.msra.mxu0 %v1117
        %1199 = vmatprep.subr.mxu0 0.0
        %1200 = vmatpush1.msra.mxu0 %v1118
        %1201 = vmatprep.subr.mxu0 0.0
        %1202 = vmatpush1.msra.mxu0 %v1119
        %1203 = vmatprep.subr.mxu0 0.0
        %1204 = vmatpush1.msra.mxu0 %v1120
        %1205 = vmatprep.subr.mxu0 0.0
        %1206 = vmatpush1.msra.mxu0 %v1121
        %1207 = vmatprep.subr.mxu0 0.0
        %1208 = vmatpush1.msra.mxu0 %v1122
        %1209 = vmatprep.subr.mxu0 0.0
        %1210 = vmatpush1.msra.mxu0 %v1123
        %1211 = vmatprep.subr.mxu0 0.0
        %1212 = vmatpush1.msra.mxu0 %v1124
        %1213 = vmatprep.mubr.f32.mxu0 %v1064
        %1214 = vmatmul.mubr.f32.gmra.mrb[0].mxu0 %v1076
        %v1215 = vpop.f32.mrb[0].mxu0
        %v1216 = vadd.f32 %v1147, %v1215
        %v1217 = vpop.f32.mrb[0].mxu0
        %1218 = vmatprep.mubr.f32.mxu0 %v1065
        %1219 = vmatmul.mubr.f32.gmra.mrb[0].mxu0 %v1077
        %v1220 = vpop.f32.mrb[0].mxu0
        %v1221 = vadd.f32 %v1147, %v1220
        %v1222 = vpop.f32.mrb[0].mxu0
        %1223 = vmatprep.mubr.f32.mxu0 %v1066
        %1224 = vmatmul.mubr.f32.gmra.mrb[0].mxu0 %v1078
        %v1225 = vpop.f32.mrb[0].mxu0
        %v1226 = vadd.f32 %v1147, %v1225
        %v1227 = vpop.f32.mrb[0].mxu0
        %1228 = vmatprep.mubr.f32.mxu0 %v1067
        %1229 = vmatmul.mubr.f32.gmra.mrb[0].mxu0 %v1079
        %v1230 = vpop.f32.mrb[0].mxu0
        %v1231 = vadd.f32 %v1147, %v1230
        %v1232 = vpop.f32.mrb[0].mxu0
        %1233 = vdwg.mxu0
        %1234 = vmatprep.subr.mxu0 0.0
        %1235 = vmatpush1.msra.mxu0 %v1125
        %1236 = vmatprep.subr.mxu0 0.0
        %1237 = vmatpush1.msra.mxu0 %v1126
        %1238 = vmatprep.subr.mxu0 0.0
        %1239 = vmatpush1.msra.mxu0 %v1127
        %1240 = vmatprep.subr.mxu0 0.0
        %1241 = vmatpush1.msra.mxu0 %v1128
        %1242 = vmatprep.subr.mxu0 0.0
        %1243 = vmatpush1.msra.mxu0 %v1129
        %1244 = vmatprep.subr.mxu0 0.0
        %1245 = vmatpush1.msra.mxu0 %v1130
        %1246 = vmatprep.subr.mxu0 0.0
        %1247 = vmatpush1.msra.mxu0 %v1131
        %1248 = vmatprep.subr.mxu0 0.0
        %1249 = vmatpush1.msra.mxu0 %v1132
        %1250 = vmatprep.subr.mxu0 0.0
        %1251 = vmatpush1.msra.mxu0 %v1133
        %1252 = vmatprep.subr.mxu0 0.0
        %1253 = vmatpush1.msra.mxu0 %v1134
        %1254 = vmatprep.subr.mxu0 0.0
        %1255 = vmatpush1.msra.mxu0 %v1135
        %1256 = vmatprep.subr.mxu0 0.0
        %1257 = vmatpush1.msra.mxu0 %v1136
        %1258 = vmatprep.subr.mxu0 0.0
        %1259 = vmatpush1.msra.mxu0 %v1137
        %1260 = vmatprep.subr.mxu0 0.0
        %1261 = vmatpush1.msra.mxu0 %v1138
        %1262 = vmatprep.subr.mxu0 0.0
        %1263 = vmatpush1.msra.mxu0 %v1139
        %1264 = vmatprep.subr.mxu0 0.0
        %1265 = vmatpush1.msra.mxu0 %v1140
        %1266 = vmatprep.subr.mxu0 0.0
        %1267 = vmatpush1.msra.mxu0 0.0
        %1268 = vmatprep.subr.mxu0 0.0
        %1269 = vmatpush1.msra.mxu0 0.0
        %1270 = vmatprep.subr.mxu0 0.0
        %1271 = vmatpush1.msra.mxu0 0.0
        %1272 = vmatprep.subr.mxu0 0.0
        %1273 = vmatpush1.msra.mxu0 0.0
        %1274 = vmatprep.subr.mxu0 0.0
        %1275 = vmatpush1.msra.mxu0 0.0
        %1276 = vmatprep.subr.mxu0 0.0
        %1277 = vmatpush1.msra.mxu0 0.0
        %1278 = vmatprep.subr.mxu0 0.0
        %1279 = vmatpush1.msra.mxu0 0.0
        %1280 = vmatprep.subr.mxu0 0.0
        %1281 = vmatpush1.msra.mxu0 0.0
        %1282 = vmatprep.subr.mxu0 0.0
        %1283 = vmatpush1.msra.mxu0 0.0
        %1284 = vmatprep.subr.mxu0 0.0
        %1285 = vmatpush1.msra.mxu0 0.0
        %1286 = vmatprep.subr.mxu0 0.0
        %1287 = vmatpush1.msra.mxu0 0.0
        %1288 = vmatprep.subr.mxu0 0.0
        %1289 = vmatpush1.msra.mxu0 0.0
        %1290 = vmatprep.subr.mxu0 0.0
        %1291 = vmatpush1.msra.mxu0 0.0
        %1292 = vmatprep.subr.mxu0 0.0
        %1293 = vmatpush1.msra.mxu0 0.0
        %1294 = vmatprep.subr.mxu0 0.0
        %1295 = vmatpush1.msra.mxu0 0.0
        %1296 = vmatprep.subr.mxu0 0.0
        %1297 = vmatpush1.msra.mxu0 0.0
        %1298 = vmatprep.mubr.f32.mxu0 0.0
        %1299 = vmatmul.mubr.f32.gmra.mrb[0].mxu0 %v1088
        %v1300 = vpop.f32.mrb[0].mxu0
        %v1301 = vadd.f32 %v1216, %v1300
        %v1302 = vpop.f32.mrb[0].mxu0
        %1303 = vmatprep.mubr.f32.mxu0 0.0
        %1304 = vmatmul.mubr.f32.gmra.mrb[0].mxu0 %v1089
        %v1305 = vpop.f32.mrb[0].mxu0
        %v1306 = vadd.f32 %v1221, %v1305
        %v1307 = vpop.f32.mrb[0].mxu0
        %1308 = vmatprep.mubr.f32.mxu0 0.0
        %1309 = vmatmul.mubr.f32.gmra.mrb[0].mxu0 %v1090
        %v1310 = vpop.f32.mrb[0].mxu0
        %v1311 = vadd.f32 %v1226, %v1310
        %v1312 = vpop.f32.mrb[0].mxu0
        %1313 = vmatprep.mubr.f32.mxu0 0.0
        %1314 = vmatmul.mubr.f32.gmra.mrb[0].mxu0 %v1091
        %v1315 = vpop.f32.mrb[0].mxu0
        %v1316 = vadd.f32 %v1231, %v1315
        %v1317 = vpop.f32.mrb[0].mxu0
        %1318 = vdwg.mxu0
        %s1319 = scalar_lea.vmem [#allocation8], 384
        %v1320 = vld [vmem:[%s1319] sm:$0xff]
        %v1321 = vld [vmem:[%s1319 + $0x8] sm:$0xff]
        %v1322 = vld [vmem:[%s1319 + $0x10] sm:$0xff]
        %v1323 = vld [vmem:[%s1319 + $0x18] sm:$0xff]
        %v1324 = vld [vmem:[%s1319 + $0x20] sm:$0xff]
        %v1325 = vld [vmem:[%s1319 + $0x28] sm:$0xff]
        %v1326 = vld [vmem:[%s1319 + $0x30] sm:$0xff]
        %v1327 = vld [vmem:[%s1319 + $0x38] sm:$0xff]
        %v1328 = vld [vmem:[%s1319 + $0x40] sm:$0xff]
        %v1329 = vld [vmem:[%s1319 + $0x48] sm:$0xff]
        %v1330 = vld [vmem:[%s1319 + $0x50] sm:$0xff]
        %v1331 = vld [vmem:[%s1319 + $0x58] sm:$0xff]
        %v1332 = vld [vmem:[%s1319 + $0x60] sm:$0xff]
        %v1333 = vld [vmem:[%s1319 + $0x68] sm:$0xff]
        %v1334 = vld [vmem:[%s1319 + $0x70] sm:$0xff]
        %v1335 = vld [vmem:[%s1319 + $0x78] sm:$0xff]
        %v1336 = vld [vmem:[%s1319 + $0x80] sm:$0xff]
        %v1337 = vld [vmem:[%s1319 + $0x88] sm:$0xff]
        %v1338 = vld [vmem:[%s1319 + $0x90] sm:$0xff]
        %v1339 = vld [vmem:[%s1319 + $0x98] sm:$0xff]
        %v1340 = vld [vmem:[%s1319 + $0xa0] sm:$0xff]
        %v1341 = vld [vmem:[%s1319 + $0xa8] sm:$0xff]
        %v1342 = vld [vmem:[%s1319 + $0xb0] sm:$0xff]
        %v1343 = vld [vmem:[%s1319 + $0xb8] sm:$0xff]
        %v1344 = vld [vmem:[%s1319 + $0xc0] sm:$0xff]
        %v1345 = vld [vmem:[%s1319 + $0xc8] sm:$0xff]
        %v1346 = vld [vmem:[%s1319 + $0xd0] sm:$0xff]
        %v1347 = vld [vmem:[%s1319 + $0xd8] sm:$0xff]
        %v1348 = vld [vmem:[%s1319 + $0xe0] sm:$0xff]
        %v1349 = vld [vmem:[%s1319 + $0xe8] sm:$0xff]
        %v1350 = vld [vmem:[%s1319 + $0xf0] sm:$0xff]
        %v1351 = vld [vmem:[%s1319 + $0xf8] sm:$0xff]
        %v1352 = vld [vmem:[%s1319 + $0x100] sm:$0xff]
        %v1353 = vld [vmem:[%s1319 + $0x108] sm:$0xff]
        %v1354 = vld [vmem:[%s1319 + $0x110] sm:$0xff]
        %v1355 = vld [vmem:[%s1319 + $0x118] sm:$0xff]
        %v1356 = vld [vmem:[%s1319 + $0x120] sm:$0xff]
        %v1357 = vld [vmem:[%s1319 + $0x128] sm:$0xff]
        %v1358 = vld [vmem:[%s1319 + $0x130] sm:$0xff]
        %v1359 = vld [vmem:[%s1319 + $0x138] sm:$0xff]
        %v1360 = vld [vmem:[%s1319 + $0x140] sm:$0xff]
        %v1361 = vld [vmem:[%s1319 + $0x148] sm:$0xff]
        %v1362 = vld [vmem:[%s1319 + $0x150] sm:$0xff]
        %v1363 = vld [vmem:[%s1319 + $0x158] sm:$0xff]
        %v1364 = vld [vmem:[%s1319 + $0x160] sm:$0xff]
        %v1365 = vld [vmem:[%s1319 + $0x168] sm:$0xff]
        %v1366 = vld [vmem:[%s1319 + $0x170] sm:$0xff]
        %v1367 = vld [vmem:[%s1319 + $0x178] sm:$0xff]
        %s1368 = scalar_lea.vmem %s6, 1
        %v1369 = vld [vmem:[%s1368] sm:$0x1]
        %v1371 = vlaneseq
        %v1372 = vshrl.u32 %v1371, 7
        %v1373 = vsub.s32 0, %v1372
        %v1374 = vrot.slane %v1369, %v1373
        %1376 = vmatprep.subr.mxu0 0.0
        %1377 = vmatpush1.msra.mxu0 %v1320
        %1378 = vmatprep.subr.mxu0 0.0
        %1379 = vmatpush1.msra.mxu0 %v1321
        %1380 = vmatprep.subr.mxu0 0.0
        %1381 = vmatpush1.msra.mxu0 %v1322
        %1382 = vmatprep.subr.mxu0 0.0
        %1383 = vmatpush1.msra.mxu0 %v1323
        %1384 = vmatprep.subr.mxu0 0.0
        %1385 = vmatpush1.msra.mxu0 %v1324
        %1386 = vmatprep.subr.mxu0 0.0
        %1387 = vmatpush1.msra.mxu0 %v1325
        %1388 = vmatprep.subr.mxu0 0.0
        %1389 = vmatpush1.msra.mxu0 %v1326
        %1390 = vmatprep.subr.mxu0 0.0
        %1391 = vmatpush1.msra.mxu0 %v1327
        %1392 = vmatprep.subr.mxu0 0.0
        %1393 = vmatpush1.msra.mxu0 %v1328
        %1394 = vmatprep.subr.mxu0 0.0
        %1395 = vmatpush1.msra.mxu0 %v1329
        %1396 = vmatprep.subr.mxu0 0.0
        %1397 = vmatpush1.msra.mxu0 %v1330
        %1398 = vmatprep.subr.mxu0 0.0
        %1399 = vmatpush1.msra.mxu0 %v1331
        %1400 = vmatprep.subr.mxu0 0.0
        %1401 = vmatpush1.msra.mxu0 %v1332
        %1402 = vmatprep.subr.mxu0 0.0
        %1403 = vmatpush1.msra.mxu0 %v1333
        %1404 = vmatprep.subr.mxu0 0.0
        %1405 = vmatpush1.msra.mxu0 %v1334
        %1406 = vmatprep.subr.mxu0 0.0
        %1407 = vmatpush1.msra.mxu0 %v1335
        %1408 = vmatprep.subr.mxu0 0.0
        %1409 = vmatpush1.msra.mxu0 %v1336
        %1410 = vmatprep.subr.mxu0 0.0
        %1411 = vmatpush1.msra.mxu0 %v1337
        %1412 = vmatprep.subr.mxu0 0.0
        %1413 = vmatpush1.msra.mxu0 %v1338
        %1414 = vmatprep.subr.mxu0 0.0
        %1415 = vmatpush1.msra.mxu0 %v1339
        %1416 = vmatprep.subr.mxu0 0.0
        %1417 = vmatpush1.msra.mxu0 %v1340
        %1418 = vmatprep.subr.mxu0 0.0
        %1419 = vmatpush1.msra.mxu0 %v1341
        %1420 = vmatprep.subr.mxu0 0.0
        %1421 = vmatpush1.msra.mxu0 %v1342
        %1422 = vmatprep.subr.mxu0 0.0
        %1423 = vmatpush1.msra.mxu0 %v1343
        %1424 = vmatprep.subr.mxu0 0.0
        %1425 = vmatpush1.msra.mxu0 %v1344
        %1426 = vmatprep.subr.mxu0 0.0
        %1427 = vmatpush1.msra.mxu0 %v1345
        %1428 = vmatprep.subr.mxu0 0.0
        %1429 = vmatpush1.msra.mxu0 %v1346
        %1430 = vmatprep.subr.mxu0 0.0
        %1431 = vmatpush1.msra.mxu0 %v1347
        %1432 = vmatprep.subr.mxu0 0.0
        %1433 = vmatpush1.msra.mxu0 %v1348
        %1434 = vmatprep.subr.mxu0 0.0
        %1435 = vmatpush1.msra.mxu0 %v1349
        %1436 = vmatprep.subr.mxu0 0.0
        %1437 = vmatpush1.msra.mxu0 %v1350
        %1438 = vmatprep.subr.mxu0 0.0
        %1439 = vmatpush1.msra.mxu0 %v1351
        %1440 = vmatprep.mubr.f32.mxu0 %v1064
        %1441 = vmatmul.mubr.f32.gmra.mrb[0].mxu0 %v1076
        %v1442 = vpop.f32.mrb[0].mxu0
        %v1443 = vadd.f32 %v1374, %v1442
        %v1444 = vpop.f32.mrb[0].mxu0
        %1445 = vmatprep.mubr.f32.mxu0 %v1065
        %1446 = vmatmul.mubr.f32.gmra.mrb[0].mxu0 %v1077
        %v1447 = vpop.f32.mrb[0].mxu0
        %v1448 = vadd.f32 %v1374, %v1447
        %v1449 = vpop.f32.mrb[0].mxu0
        %1450 = vmatprep.mubr.f32.mxu0 %v1066
        %1451 = vmatmul.mubr.f32.gmra.mrb[0].mxu0 %v1078
        %v1452 = vpop.f32.mrb[0].mxu0
        %v1453 = vadd.f32 %v1374, %v1452
        %v1454 = vpop.f32.mrb[0].mxu0
        %1455 = vmatprep.mubr.f32.mxu0 %v1067
        %1456 = vmatmul.mubr.f32.gmra.mrb[0].mxu0 %v1079
        %v1457 = vpop.f32.mrb[0].mxu0
        %v1458 = vadd.f32 %v1374, %v1457
        %v1459 = vpop.f32.mrb[0].mxu0
        %1460 = vdwg.mxu0
        %1461 = vmatprep.subr.mxu0 0.0
        %1462 = vmatpush1.msra.mxu0 %v1352
        %1463 = vmatprep.subr.mxu0 0.0
        %1464 = vmatpush1.msra.mxu0 %v1353
        %1465 = vmatprep.subr.mxu0 0.0
        %1466 = vmatpush1.msra.mxu0 %v1354
        %1467 = vmatprep.subr.mxu0 0.0
        %1468 = vmatpush1.msra.mxu0 %v1355
        %1469 = vmatprep.subr.mxu0 0.0
        %1470 = vmatpush1.msra.mxu0 %v1356
        %1471 = vmatprep.subr.mxu0 0.0
        %1472 = vmatpush1.msra.mxu0 %v1357
        %1473 = vmatprep.subr.mxu0 0.0
        %1474 = vmatpush1.msra.mxu0 %v1358
        %1475 = vmatprep.subr.mxu0 0.0
        %1476 = vmatpush1.msra.mxu0 %v1359
        %1477 = vmatprep.subr.mxu0 0.0
        %1478 = vmatpush1.msra.mxu0 %v1360
        %1479 = vmatprep.subr.mxu0 0.0
        %1480 = vmatpush1.msra.mxu0 %v1361
        %1481 = vmatprep.subr.mxu0 0.0
        %1482 = vmatpush1.msra.mxu0 %v1362
        %1483 = vmatprep.subr.mxu0 0.0
        %1484 = vmatpush1.msra.mxu0 %v1363
        %1485 = vmatprep.subr.mxu0 0.0
        %1486 = vmatpush1.msra.mxu0 %v1364
        %1487 = vmatprep.subr.mxu0 0.0
        %1488 = vmatpush1.msra.mxu0 %v1365
        %1489 = vmatprep.subr.mxu0 0.0
        %1490 = vmatpush1.msra.mxu0 %v1366
        %1491 = vmatprep.subr.mxu0 0.0
        %1492 = vmatpush1.msra.mxu0 %v1367
        %1493 = vmatprep.subr.mxu0 0.0
        %1494 = vmatpush1.msra.mxu0 0.0
        %1495 = vmatprep.subr.mxu0 0.0
        %1496 = vmatpush1.msra.mxu0 0.0
        %1497 = vmatprep.subr.mxu0 0.0
        %1498 = vmatpush1.msra.mxu0 0.0
        %1499 = vmatprep.subr.mxu0 0.0
        %1500 = vmatpush1.msra.mxu0 0.0
        %1501 = vmatprep.subr.mxu0 0.0
        %1502 = vmatpush1.msra.mxu0 0.0
        %1503 = vmatprep.subr.mxu0 0.0
        %1504 = vmatpush1.msra.mxu0 0.0
        %1505 = vmatprep.subr.mxu0 0.0
        %1506 = vmatpush1.msra.mxu0 0.0
        %1507 = vmatprep.subr.mxu0 0.0
        %1508 = vmatpush1.msra.mxu0 0.0
        %1509 = vmatprep.subr.mxu0 0.0
        %1510 = vmatpush1.msra.mxu0 0.0
        %1511 = vmatprep.subr.mxu0 0.0
        %1512 = vmatpush1.msra.mxu0 0.0
        %1513 = vmatprep.subr.mxu0 0.0
        %1514 = vmatpush1.msra.mxu0 0.0
        %1515 = vmatprep.subr.mxu0 0.0
        %1516 = vmatpush1.msra.mxu0 0.0
        %1517 = vmatprep.subr.mxu0 0.0
        %1518 = vmatpush1.msra.mxu0 0.0
        %1519 = vmatprep.subr.mxu0 0.0
        %1520 = vmatpush1.msra.mxu0 0.0
        %1521 = vmatprep.subr.mxu0 0.0
        %1522 = vmatpush1.msra.mxu0 0.0
        %1523 = vmatprep.subr.mxu0 0.0
        %1524 = vmatpush1.msra.mxu0 0.0
        %1525 = vmatprep.mubr.f32.mxu0 0.0
        %1526 = vmatmul.mubr.f32.gmra.mrb[0].mxu0 %v1088
        %v1527 = vpop.f32.mrb[0].mxu0
        %v1528 = vadd.f32 %v1443, %v1527
        %v1529 = vpop.f32.mrb[0].mxu0
        %1530 = vmatprep.mubr.f32.mxu0 0.0
        %1531 = vmatmul.mubr.f32.gmra.mrb[0].mxu0 %v1089
        %v1532 = vpop.f32.mrb[0].mxu0
        %v1533 = vadd.f32 %v1448, %v1532
        %v1534 = vpop.f32.mrb[0].mxu0
        %1535 = vmatprep.mubr.f32.mxu0 0.0
        %1536 = vmatmul.mubr.f32.gmra.mrb[0].mxu0 %v1090
        %v1537 = vpop.f32.mrb[0].mxu0
        %v1538 = vadd.f32 %v1453, %v1537
        %v1539 = vpop.f32.mrb[0].mxu0
        %1540 = vmatprep.mubr.f32.mxu0 0.0
        %1541 = vmatmul.mubr.f32.gmra.mrb[0].mxu0 %v1091
        %v1542 = vpop.f32.mrb[0].mxu0
        %v1543 = vadd.f32 %v1458, %v1542
        %v1544 = vpop.f32.mrb[0].mxu0
        %1545 = vdwg.mxu0
        %v1546 = vxor.u32 %v1528, 2147483648
        %v1547 = vxor.u32 %v1533, 2147483648
        %v1548 = vxor.u32 %v1538, 2147483648
        %v1549 = vxor.u32 %v1543, 2147483648
        %v1550 = vmul.f32 %v1546, 1.442695
        %v1551 = vpow.pop %v1550
        %v1552 = vmul.f32 %v1547, 1.442695
        %v1553 = vpow.pop %v1552
        %v1554 = vmul.f32 %v1548, 1.442695
        %v1555 = vpow.pop %v1554
        %v1556 = vmul.f32 %v1549, 1.442695
        %v1557 = vpow.pop %v1556
        %v1558 = vadd.f32 %v1551, 1.0
        %v1559 = vadd.f32 %v1553, 1.0
        %v1560 = vadd.f32 %v1555, 1.0
        %v1561 = vadd.f32 %v1557, 1.0
        %v1562 = vrcp.pop %v1558
        %v1563 = vmul.f32 1.0, %v1562
        %v1564 = vrcp.pop %v1559
        %v1565 = vmul.f32 1.0, %v1564
        %v1566 = vrcp.pop %v1560
        %v1567 = vmul.f32 1.0, %v1566
        %v1568 = vrcp.pop %v1561
        %v1569 = vmul.f32 1.0, %v1568
        %v1570 = vmul.f32 %v1301, %v1563
        %v1571 = vmul.f32 %v1306, %v1565
        %v1572 = vmul.f32 %v1311, %v1567
        %v1573 = vmul.f32 %v1316, %v1569
        %v1574 = vadd.f32 %v1570, %v1064
        %v1575 = vadd.f32 %v1571, %v1065
        %v1576 = vadd.f32 %v1572, %v1066
        %v1577 = vadd.f32 %v1573, %v1067
        %v1578 = vmul.f32 %v1574, 0.70710677
        %v1579 = vmul.f32 %v1575, 0.70710677
        %v1580 = vmul.f32 %v1576, 0.70710677
        %v1581 = vmul.f32 %v1577, 0.70710677
        %v1582 = vrot.slane %v1578, 7
        %v1583 = vrot.slane %v1579, 7
        %v1584 = vrot.slane %v1580, 7
        %v1585 = vrot.slane %v1581, 7
        %v1586 = vsel %vm544, %v1584, %v1585
        %v1587 = vsel %vm544, %v1583, %v1584
        %v1588 = vsel %vm544, %v1582, %v1583
        %v1589 = vsel %vm544, %v1585, %v1582
        %v1590 = vsel %vm553, %v1589, 0.0
        %v1591 = vsel %vm554, %v1588, 0.0
        %v1592 = vsel %vm555, %v1587, 0.0
        %v1593 = vsel %vm556, %v1586, 0.0
        %v1594 = vrot.slane %v1578, 1
        %v1595 = vrot.slane %v1579, 1
        %v1596 = vrot.slane %v1580, 1
        %v1597 = vrot.slane %v1581, 1
        %v1598 = vsel %vm565, %v1596, %v1597
        %v1599 = vsel %vm565, %v1595, %v1596
        %v1600 = vsel %vm565, %v1594, %v1595
        %v1601 = vsel %vm565, %v1597, %v1594
        %v1602 = vsel %vm574, %v1600, 0.0
        %v1603 = vsel %vm575, %v1599, 0.0
        %v1604 = vsel %vm576, %v1598, 0.0
        %v1605 = vsel %vm577, %v1601, 0.0
        %s1606 = scalar_lea.vmem [#allocation7], 768
        %v1607 = vld [vmem:[%s1606] sm:$0xff]
        %v1608 = vld [vmem:[%s1606 + $0x8] sm:$0xff]
        %v1609 = vld [vmem:[%s1606 + $0x10] sm:$0xff]
        %v1610 = vld [vmem:[%s1606 + $0x18] sm:$0xff]
        %v1611 = vld [vmem:[%s1606 + $0x20] sm:$0xff]
        %v1612 = vld [vmem:[%s1606 + $0x28] sm:$0xff]
        %v1613 = vld [vmem:[%s1606 + $0x30] sm:$0xff]
        %v1614 = vld [vmem:[%s1606 + $0x38] sm:$0xff]
        %v1615 = vld [vmem:[%s1606 + $0x40] sm:$0xff]
        %v1616 = vld [vmem:[%s1606 + $0x48] sm:$0xff]
        %v1617 = vld [vmem:[%s1606 + $0x50] sm:$0xff]
        %v1618 = vld [vmem:[%s1606 + $0x58] sm:$0xff]
        %v1619 = vld [vmem:[%s1606 + $0x60] sm:$0xff]
        %v1620 = vld [vmem:[%s1606 + $0x68] sm:$0xff]
        %v1621 = vld [vmem:[%s1606 + $0x70] sm:$0xff]
        %v1622 = vld [vmem:[%s1606 + $0x78] sm:$0xff]
        %v1623 = vld [vmem:[%s1606 + $0x80] sm:$0xff]
        %v1624 = vld [vmem:[%s1606 + $0x88] sm:$0xff]
        %v1625 = vld [vmem:[%s1606 + $0x90] sm:$0xff]
        %v1626 = vld [vmem:[%s1606 + $0x98] sm:$0xff]
        %v1627 = vld [vmem:[%s1606 + $0xa0] sm:$0xff]
        %v1628 = vld [vmem:[%s1606 + $0xa8] sm:$0xff]
        %v1629 = vld [vmem:[%s1606 + $0xb0] sm:$0xff]
        %v1630 = vld [vmem:[%s1606 + $0xb8] sm:$0xff]
        %v1631 = vld [vmem:[%s1606 + $0xc0] sm:$0xff]
        %v1632 = vld [vmem:[%s1606 + $0xc8] sm:$0xff]
        %v1633 = vld [vmem:[%s1606 + $0xd0] sm:$0xff]
        %v1634 = vld [vmem:[%s1606 + $0xd8] sm:$0xff]
        %v1635 = vld [vmem:[%s1606 + $0xe0] sm:$0xff]
        %v1636 = vld [vmem:[%s1606 + $0xe8] sm:$0xff]
        %v1637 = vld [vmem:[%s1606 + $0xf0] sm:$0xff]
        %v1638 = vld [vmem:[%s1606 + $0xf8] sm:$0xff]
        %v1639 = vld [vmem:[%s1606 + $0x100] sm:$0xff]
        %v1640 = vld [vmem:[%s1606 + $0x108] sm:$0xff]
        %v1641 = vld [vmem:[%s1606 + $0x110] sm:$0xff]
        %v1642 = vld [vmem:[%s1606 + $0x118] sm:$0xff]
        %v1643 = vld [vmem:[%s1606 + $0x120] sm:$0xff]
        %v1644 = vld [vmem:[%s1606 + $0x128] sm:$0xff]
        %v1645 = vld [vmem:[%s1606 + $0x130] sm:$0xff]
        %v1646 = vld [vmem:[%s1606 + $0x138] sm:$0xff]
        %v1647 = vld [vmem:[%s1606 + $0x140] sm:$0xff]
        %v1648 = vld [vmem:[%s1606 + $0x148] sm:$0xff]
        %v1649 = vld [vmem:[%s1606 + $0x150] sm:$0xff]
        %v1650 = vld [vmem:[%s1606 + $0x158] sm:$0xff]
        %v1651 = vld [vmem:[%s1606 + $0x160] sm:$0xff]
        %v1652 = vld [vmem:[%s1606 + $0x168] sm:$0xff]
        %v1653 = vld [vmem:[%s1606 + $0x170] sm:$0xff]
        %v1654 = vld [vmem:[%s1606 + $0x178] sm:$0xff]
        %s1655 = scalar_lea.vmem %s5, 2
        %v1656 = vld [vmem:[%s1655] sm:$0x1]
        %v1658 = vlaneseq
        %v1659 = vshrl.u32 %v1658, 7
        %v1660 = vsub.s32 0, %v1659
        %v1661 = vrot.slane %v1656, %v1660
        %1663 = vmatprep.subr.mxu0 0.0
        %1664 = vmatpush1.msra.mxu0 %v1607
        %1665 = vmatprep.subr.mxu0 0.0
        %1666 = vmatpush1.msra.mxu0 %v1608
        %1667 = vmatprep.subr.mxu0 0.0
        %1668 = vmatpush1.msra.mxu0 %v1609
        %1669 = vmatprep.subr.mxu0 0.0
        %1670 = vmatpush1.msra.mxu0 %v1610
        %1671 = vmatprep.subr.mxu0 0.0
        %1672 = vmatpush1.msra.mxu0 %v1611
        %1673 = vmatprep.subr.mxu0 0.0
        %1674 = vmatpush1.msra.mxu0 %v1612
        %1675 = vmatprep.subr.mxu0 0.0
        %1676 = vmatpush1.msra.mxu0 %v1613
        %1677 = vmatprep.subr.mxu0 0.0
        %1678 = vmatpush1.msra.mxu0 %v1614
        %1679 = vmatprep.subr.mxu0 0.0
        %1680 = vmatpush1.msra.mxu0 %v1615
        %1681 = vmatprep.subr.mxu0 0.0
        %1682 = vmatpush1.msra.mxu0 %v1616
        %1683 = vmatprep.subr.mxu0 0.0
        %1684 = vmatpush1.msra.mxu0 %v1617
        %1685 = vmatprep.subr.mxu0 0.0
        %1686 = vmatpush1.msra.mxu0 %v1618
        %1687 = vmatprep.subr.mxu0 0.0
        %1688 = vmatpush1.msra.mxu0 %v1619
        %1689 = vmatprep.subr.mxu0 0.0
        %1690 = vmatpush1.msra.mxu0 %v1620
        %1691 = vmatprep.subr.mxu0 0.0
        %1692 = vmatpush1.msra.mxu0 %v1621
        %1693 = vmatprep.subr.mxu0 0.0
        %1694 = vmatpush1.msra.mxu0 %v1622
        %1695 = vmatprep.subr.mxu0 0.0
        %1696 = vmatpush1.msra.mxu0 %v1623
        %1697 = vmatprep.subr.mxu0 0.0
        %1698 = vmatpush1.msra.mxu0 %v1624
        %1699 = vmatprep.subr.mxu0 0.0
        %1700 = vmatpush1.msra.mxu0 %v1625
        %1701 = vmatprep.subr.mxu0 0.0
        %1702 = vmatpush1.msra.mxu0 %v1626
        %1703 = vmatprep.subr.mxu0 0.0
        %1704 = vmatpush1.msra.mxu0 %v1627
        %1705 = vmatprep.subr.mxu0 0.0
        %1706 = vmatpush1.msra.mxu0 %v1628
        %1707 = vmatprep.subr.mxu0 0.0
        %1708 = vmatpush1.msra.mxu0 %v1629
        %1709 = vmatprep.subr.mxu0 0.0
        %1710 = vmatpush1.msra.mxu0 %v1630
        %1711 = vmatprep.subr.mxu0 0.0
        %1712 = vmatpush1.msra.mxu0 %v1631
        %1713 = vmatprep.subr.mxu0 0.0
        %1714 = vmatpush1.msra.mxu0 %v1632
        %1715 = vmatprep.subr.mxu0 0.0
        %1716 = vmatpush1.msra.mxu0 %v1633
        %1717 = vmatprep.subr.mxu0 0.0
        %1718 = vmatpush1.msra.mxu0 %v1634
        %1719 = vmatprep.subr.mxu0 0.0
        %1720 = vmatpush1.msra.mxu0 %v1635
        %1721 = vmatprep.subr.mxu0 0.0
        %1722 = vmatpush1.msra.mxu0 %v1636
        %1723 = vmatprep.subr.mxu0 0.0
        %1724 = vmatpush1.msra.mxu0 %v1637
        %1725 = vmatprep.subr.mxu0 0.0
        %1726 = vmatpush1.msra.mxu0 %v1638
        %1727 = vmatprep.mubr.f32.mxu0 %v1578
        %1728 = vmatmul.mubr.f32.gmra.mrb[0].mxu0 %v1590
        %v1729 = vpop.f32.mrb[0].mxu0
        %v1730 = vadd.f32 %v1661, %v1729
        %v1731 = vpop.f32.mrb[0].mxu0
        %1732 = vmatprep.mubr.f32.mxu0 %v1579
        %1733 = vmatmul.mubr.f32.gmra.mrb[0].mxu0 %v1591
        %v1734 = vpop.f32.mrb[0].mxu0
        %v1735 = vadd.f32 %v1661, %v1734
        %v1736 = vpop.f32.mrb[0].mxu0
        %1737 = vmatprep.mubr.f32.mxu0 %v1580
        %1738 = vmatmul.mubr.f32.gmra.mrb[0].mxu0 %v1592
        %v1739 = vpop.f32.mrb[0].mxu0
        %v1740 = vadd.f32 %v1661, %v1739
        %v1741 = vpop.f32.mrb[0].mxu0
        %1742 = vmatprep.mubr.f32.mxu0 %v1581
        %1743 = vmatmul.mubr.f32.gmra.mrb[0].mxu0 %v1593
        %v1744 = vpop.f32.mrb[0].mxu0
        %v1745 = vadd.f32 %v1661, %v1744
        %v1746 = vpop.f32.mrb[0].mxu0
        %1747 = vdwg.mxu0
        %1748 = vmatprep.subr.mxu0 0.0
        %1749 = vmatpush1.msra.mxu0 %v1639
        %1750 = vmatprep.subr.mxu0 0.0
        %1751 = vmatpush1.msra.mxu0 %v1640
        %1752 = vmatprep.subr.mxu0 0.0
        %1753 = vmatpush1.msra.mxu0 %v1641
        %1754 = vmatprep.subr.mxu0 0.0
        %1755 = vmatpush1.msra.mxu0 %v1642
        %1756 = vmatprep.subr.mxu0 0.0
        %1757 = vmatpush1.msra.mxu0 %v1643
        %1758 = vmatprep.subr.mxu0 0.0
        %1759 = vmatpush1.msra.mxu0 %v1644
        %1760 = vmatprep.subr.mxu0 0.0
        %1761 = vmatpush1.msra.mxu0 %v1645
        %1762 = vmatprep.subr.mxu0 0.0
        %1763 = vmatpush1.msra.mxu0 %v1646
        %1764 = vmatprep.subr.mxu0 0.0
        %1765 = vmatpush1.msra.mxu0 %v1647
        %1766 = vmatprep.subr.mxu0 0.0
        %1767 = vmatpush1.msra.mxu0 %v1648
        %1768 = vmatprep.subr.mxu0 0.0
        %1769 = vmatpush1.msra.mxu0 %v1649
        %1770 = vmatprep.subr.mxu0 0.0
        %1771 = vmatpush1.msra.mxu0 %v1650
        %1772 = vmatprep.subr.mxu0 0.0
        %1773 = vmatpush1.msra.mxu0 %v1651
        %1774 = vmatprep.subr.mxu0 0.0
        %1775 = vmatpush1.msra.mxu0 %v1652
        %1776 = vmatprep.subr.mxu0 0.0
        %1777 = vmatpush1.msra.mxu0 %v1653
        %1778 = vmatprep.subr.mxu0 0.0
        %1779 = vmatpush1.msra.mxu0 %v1654
        %1780 = vmatprep.subr.mxu0 0.0
        %1781 = vmatpush1.msra.mxu0 0.0
        %1782 = vmatprep.subr.mxu0 0.0
        %1783 = vmatpush1.msra.mxu0 0.0
        %1784 = vmatprep.subr.mxu0 0.0
        %1785 = vmatpush1.msra.mxu0 0.0
        %1786 = vmatprep.subr.mxu0 0.0
        %1787 = vmatpush1.msra.mxu0 0.0
        %1788 = vmatprep.subr.mxu0 0.0
        %1789 = vmatpush1.msra.mxu0 0.0
        %1790 = vmatprep.subr.mxu0 0.0
        %1791 = vmatpush1.msra.mxu0 0.0
        %1792 = vmatprep.subr.mxu0 0.0
        %1793 = vmatpush1.msra.mxu0 0.0
        %1794 = vmatprep.subr.mxu0 0.0
        %1795 = vmatpush1.msra.mxu0 0.0
        %1796 = vmatprep.subr.mxu0 0.0
        %1797 = vmatpush1.msra.mxu0 0.0
        %1798 = vmatprep.subr.mxu0 0.0
        %1799 = vmatpush1.msra.mxu0 0.0
        %1800 = vmatprep.subr.mxu0 0.0
        %1801 = vmatpush1.msra.mxu0 0.0
        %1802 = vmatprep.subr.mxu0 0.0
        %1803 = vmatpush1.msra.mxu0 0.0
        %1804 = vmatprep.subr.mxu0 0.0
        %1805 = vmatpush1.msra.mxu0 0.0
        %1806 = vmatprep.subr.mxu0 0.0
        %1807 = vmatpush1.msra.mxu0 0.0
        %1808 = vmatprep.subr.mxu0 0.0
        %1809 = vmatpush1.msra.mxu0 0.0
        %1810 = vmatprep.subr.mxu0 0.0
        %1811 = vmatpush1.msra.mxu0 0.0
        %1812 = vmatprep.mubr.f32.mxu0 0.0
        %1813 = vmatmul.mubr.f32.gmra.mrb[0].mxu0 %v1602
        %v1814 = vpop.f32.mrb[0].mxu0
        %v1815 = vadd.f32 %v1730, %v1814
        %v1816 = vpop.f32.mrb[0].mxu0
        %1817 = vmatprep.mubr.f32.mxu0 0.0
        %1818 = vmatmul.mubr.f32.gmra.mrb[0].mxu0 %v1603
        %v1819 = vpop.f32.mrb[0].mxu0
        %v1820 = vadd.f32 %v1735, %v1819
        %v1821 = vpop.f32.mrb[0].mxu0
        %1822 = vmatprep.mubr.f32.mxu0 0.0
        %1823 = vmatmul.mubr.f32.gmra.mrb[0].mxu0 %v1604
        %v1824 = vpop.f32.mrb[0].mxu0
        %v1825 = vadd.f32 %v1740, %v1824
        %v1826 = vpop.f32.mrb[0].mxu0
        %1827 = vmatprep.mubr.f32.mxu0 0.0
        %1828 = vmatmul.mubr.f32.gmra.mrb[0].mxu0 %v1605
        %v1829 = vpop.f32.mrb[0].mxu0
        %v1830 = vadd.f32 %v1745, %v1829
        %v1831 = vpop.f32.mrb[0].mxu0
        %1832 = vdwg.mxu0
        %s1833 = scalar_lea.vmem [#allocation8], 768
        %v1834 = vld [vmem:[%s1833] sm:$0xff]
        %v1835 = vld [vmem:[%s1833 + $0x8] sm:$0xff]
        %v1836 = vld [vmem:[%s1833 + $0x10] sm:$0xff]
        %v1837 = vld [vmem:[%s1833 + $0x18] sm:$0xff]
        %v1838 = vld [vmem:[%s1833 + $0x20] sm:$0xff]
        %v1839 = vld [vmem:[%s1833 + $0x28] sm:$0xff]
        %v1840 = vld [vmem:[%s1833 + $0x30] sm:$0xff]
        %v1841 = vld [vmem:[%s1833 + $0x38] sm:$0xff]
        %v1842 = vld [vmem:[%s1833 + $0x40] sm:$0xff]
        %v1843 = vld [vmem:[%s1833 + $0x48] sm:$0xff]
        %v1844 = vld [vmem:[%s1833 + $0x50] sm:$0xff]
        %v1845 = vld [vmem:[%s1833 + $0x58] sm:$0xff]
        %v1846 = vld [vmem:[%s1833 + $0x60] sm:$0xff]
        %v1847 = vld [vmem:[%s1833 + $0x68] sm:$0xff]
        %v1848 = vld [vmem:[%s1833 + $0x70] sm:$0xff]
        %v1849 = vld [vmem:[%s1833 + $0x78] sm:$0xff]
        %v1850 = vld [vmem:[%s1833 + $0x80] sm:$0xff]
        %v1851 = vld [vmem:[%s1833 + $0x88] sm:$0xff]
        %v1852 = vld [vmem:[%s1833 + $0x90] sm:$0xff]
        %v1853 = vld [vmem:[%s1833 + $0x98] sm:$0xff]
        %v1854 = vld [vmem:[%s1833 + $0xa0] sm:$0xff]
        %v1855 = vld [vmem:[%s1833 + $0xa8] sm:$0xff]
        %v1856 = vld [vmem:[%s1833 + $0xb0] sm:$0xff]
        %v1857 = vld [vmem:[%s1833 + $0xb8] sm:$0xff]
        %v1858 = vld [vmem:[%s1833 + $0xc0] sm:$0xff]
        %v1859 = vld [vmem:[%s1833 + $0xc8] sm:$0xff]
        %v1860 = vld [vmem:[%s1833 + $0xd0] sm:$0xff]
        %v1861 = vld [vmem:[%s1833 + $0xd8] sm:$0xff]
        %v1862 = vld [vmem:[%s1833 + $0xe0] sm:$0xff]
        %v1863 = vld [vmem:[%s1833 + $0xe8] sm:$0xff]
        %v1864 = vld [vmem:[%s1833 + $0xf0] sm:$0xff]
        %v1865 = vld [vmem:[%s1833 + $0xf8] sm:$0xff]
        %v1866 = vld [vmem:[%s1833 + $0x100] sm:$0xff]
        %v1867 = vld [vmem:[%s1833 + $0x108] sm:$0xff]
        %v1868 = vld [vmem:[%s1833 + $0x110] sm:$0xff]
        %v1869 = vld [vmem:[%s1833 + $0x118] sm:$0xff]
        %v1870 = vld [vmem:[%s1833 + $0x120] sm:$0xff]
        %v1871 = vld [vmem:[%s1833 + $0x128] sm:$0xff]
        %v1872 = vld [vmem:[%s1833 + $0x130] sm:$0xff]
        %v1873 = vld [vmem:[%s1833 + $0x138] sm:$0xff]
        %v1874 = vld [vmem:[%s1833 + $0x140] sm:$0xff]
        %v1875 = vld [vmem:[%s1833 + $0x148] sm:$0xff]
        %v1876 = vld [vmem:[%s1833 + $0x150] sm:$0xff]
        %v1877 = vld [vmem:[%s1833 + $0x158] sm:$0xff]
        %v1878 = vld [vmem:[%s1833 + $0x160] sm:$0xff]
        %v1879 = vld [vmem:[%s1833 + $0x168] sm:$0xff]
        %v1880 = vld [vmem:[%s1833 + $0x170] sm:$0xff]
        %v1881 = vld [vmem:[%s1833 + $0x178] sm:$0xff]
        %s1882 = scalar_lea.vmem %s6, 2
        %v1883 = vld [vmem:[%s1882] sm:$0x1]
        %v1885 = vlaneseq
        %v1886 = vshrl.u32 %v1885, 7
        %v1887 = vsub.s32 0, %v1886
        %v1888 = vrot.slane %v1883, %v1887
        %1890 = vmatprep.subr.mxu0 0.0
        %1891 = vmatpush1.msra.mxu0 %v1834
        %1892 = vmatprep.subr.mxu0 0.0
        %1893 = vmatpush1.msra.mxu0 %v1835
        %1894 = vmatprep.subr.mxu0 0.0
        %1895 = vmatpush1.msra.mxu0 %v1836
        %1896 = vmatprep.subr.mxu0 0.0
        %1897 = vmatpush1.msra.mxu0 %v1837
        %1898 = vmatprep.subr.mxu0 0.0
        %1899 = vmatpush1.msra.mxu0 %v1838
        %1900 = vmatprep.subr.mxu0 0.0
        %1901 = vmatpush1.msra.mxu0 %v1839
        %1902 = vmatprep.subr.mxu0 0.0
        %1903 = vmatpush1.msra.mxu0 %v1840
        %1904 = vmatprep.subr.mxu0 0.0
        %1905 = vmatpush1.msra.mxu0 %v1841
        %1906 = vmatprep.subr.mxu0 0.0
        %1907 = vmatpush1.msra.mxu0 %v1842
        %1908 = vmatprep.subr.mxu0 0.0
        %1909 = vmatpush1.msra.mxu0 %v1843
        %1910 = vmatprep.subr.mxu0 0.0
        %1911 = vmatpush1.msra.mxu0 %v1844
        %1912 = vmatprep.subr.mxu0 0.0
        %1913 = vmatpush1.msra.mxu0 %v1845
        %1914 = vmatprep.subr.mxu0 0.0
        %1915 = vmatpush1.msra.mxu0 %v1846
        %1916 = vmatprep.subr.mxu0 0.0
        %1917 = vmatpush1.msra.mxu0 %v1847
        %1918 = vmatprep.subr.mxu0 0.0
        %1919 = vmatpush1.msra.mxu0 %v1848
        %1920 = vmatprep.subr.mxu0 0.0
        %1921 = vmatpush1.msra.mxu0 %v1849
        %1922 = vmatprep.subr.mxu0 0.0
        %1923 = vmatpush1.msra.mxu0 %v1850
        %1924 = vmatprep.subr.mxu0 0.0
        %1925 = vmatpush1.msra.mxu0 %v1851
        %1926 = vmatprep.subr.mxu0 0.0
        %1927 = vmatpush1.msra.mxu0 %v1852
        %1928 = vmatprep.subr.mxu0 0.0
        %1929 = vmatpush1.msra.mxu0 %v1853
        %1930 = vmatprep.subr.mxu0 0.0
        %1931 = vmatpush1.msra.mxu0 %v1854
        %1932 = vmatprep.subr.mxu0 0.0
        %1933 = vmatpush1.msra.mxu0 %v1855
        %1934 = vmatprep.subr.mxu0 0.0
        %1935 = vmatpush1.msra.mxu0 %v1856
        %1936 = vmatprep.subr.mxu0 0.0
        %1937 = vmatpush1.msra.mxu0 %v1857
        %1938 = vmatprep.subr.mxu0 0.0
        %1939 = vmatpush1.msra.mxu0 %v1858
        %1940 = vmatprep.subr.mxu0 0.0
        %1941 = vmatpush1.msra.mxu0 %v1859
        %1942 = vmatprep.subr.mxu0 0.0
        %1943 = vmatpush1.msra.mxu0 %v1860
        %1944 = vmatprep.subr.mxu0 0.0
        %1945 = vmatpush1.msra.mxu0 %v1861
        %1946 = vmatprep.subr.mxu0 0.0
        %1947 = vmatpush1.msra.mxu0 %v1862
        %1948 = vmatprep.subr.mxu0 0.0
        %1949 = vmatpush1.msra.mxu0 %v1863
        %1950 = vmatprep.subr.mxu0 0.0
        %1951 = vmatpush1.msra.mxu0 %v1864
        %1952 = vmatprep.subr.mxu0 0.0
        %1953 = vmatpush1.msra.mxu0 %v1865
        %1954 = vmatprep.mubr.f32.mxu0 %v1578
        %1955 = vmatmul.mubr.f32.gmra.mrb[0].mxu0 %v1590
        %v1956 = vpop.f32.mrb[0].mxu0
        %v1957 = vadd.f32 %v1888, %v1956
        %v1958 = vpop.f32.mrb[0].mxu0
        %1959 = vmatprep.mubr.f32.mxu0 %v1579
        %1960 = vmatmul.mubr.f32.gmra.mrb[0].mxu0 %v1591
        %v1961 = vpop.f32.mrb[0].mxu0
        %v1962 = vadd.f32 %v1888, %v1961
        %v1963 = vpop.f32.mrb[0].mxu0
        %1964 = vmatprep.mubr.f32.mxu0 %v1580
        %1965 = vmatmul.mubr.f32.gmra.mrb[0].mxu0 %v1592
        %v1966 = vpop.f32.mrb[0].mxu0
        %v1967 = vadd.f32 %v1888, %v1966
        %v1968 = vpop.f32.mrb[0].mxu0
        %1969 = vmatprep.mubr.f32.mxu0 %v1581
        %1970 = vmatmul.mubr.f32.gmra.mrb[0].mxu0 %v1593
        %v1971 = vpop.f32.mrb[0].mxu0
        %v1972 = vadd.f32 %v1888, %v1971
        %v1973 = vpop.f32.mrb[0].mxu0
        %1974 = vdwg.mxu0
        %1975 = vmatprep.subr.mxu0 0.0
        %1976 = vmatpush1.msra.mxu0 %v1866
        %1977 = vmatprep.subr.mxu0 0.0
        %1978 = vmatpush1.msra.mxu0 %v1867
        %1979 = vmatprep.subr.mxu0 0.0
        %1980 = vmatpush1.msra.mxu0 %v1868
        %1981 = vmatprep.subr.mxu0 0.0
        %1982 = vmatpush1.msra.mxu0 %v1869
        %1983 = vmatprep.subr.mxu0 0.0
        %1984 = vmatpush1.msra.mxu0 %v1870
        %1985 = vmatprep.subr.mxu0 0.0
        %1986 = vmatpush1.msra.mxu0 %v1871
        %1987 = vmatprep.subr.mxu0 0.0
        %1988 = vmatpush1.msra.mxu0 %v1872
        %1989 = vmatprep.subr.mxu0 0.0
        %1990 = vmatpush1.msra.mxu0 %v1873
        %1991 = vmatprep.subr.mxu0 0.0
        %1992 = vmatpush1.msra.mxu0 %v1874
        %1993 = vmatprep.subr.mxu0 0.0
        %1994 = vmatpush1.msra.mxu0 %v1875
        %1995 = vmatprep.subr.mxu0 0.0
        %1996 = vmatpush1.msra.mxu0 %v1876
        %1997 = vmatprep.subr.mxu0 0.0
        %1998 = vmatpush1.msra.mxu0 %v1877
        %1999 = vmatprep.subr.mxu0 0.0
        %2000 = vmatpush1.msra.mxu0 %v1878
        %2001 = vmatprep.subr.mxu0 0.0
        %2002 = vmatpush1.msra.mxu0 %v1879
        %2003 = vmatprep.subr.mxu0 0.0
        %2004 = vmatpush1.msra.mxu0 %v1880
        %2005 = vmatprep.subr.mxu0 0.0
        %2006 = vmatpush1.msra.mxu0 %v1881
        %2007 = vmatprep.subr.mxu0 0.0
        %2008 = vmatpush1.msra.mxu0 0.0
        %2009 = vmatprep.subr.mxu0 0.0
        %2010 = vmatpush1.msra.mxu0 0.0
        %2011 = vmatprep.subr.mxu0 0.0
        %2012 = vmatpush1.msra.mxu0 0.0
        %2013 = vmatprep.subr.mxu0 0.0
        %2014 = vmatpush1.msra.mxu0 0.0
        %2015 = vmatprep.subr.mxu0 0.0
        %2016 = vmatpush1.msra.mxu0 0.0
        %2017 = vmatprep.subr.mxu0 0.0
        %2018 = vmatpush1.msra.mxu0 0.0
        %2019 = vmatprep.subr.mxu0 0.0
        %2020 = vmatpush1.msra.mxu0 0.0
        %2021 = vmatprep.subr.mxu0 0.0
        %2022 = vmatpush1.msra.mxu0 0.0
        %2023 = vmatprep.subr.mxu0 0.0
        %2024 = vmatpush1.msra.mxu0 0.0
        %2025 = vmatprep.subr.mxu0 0.0
        %2026 = vmatpush1.msra.mxu0 0.0
        %2027 = vmatprep.subr.mxu0 0.0
        %2028 = vmatpush1.msra.mxu0 0.0
        %2029 = vmatprep.subr.mxu0 0.0
        %2030 = vmatpush1.msra.mxu0 0.0
        %2031 = vmatprep.subr.mxu0 0.0
        %2032 = vmatpush1.msra.mxu0 0.0
        %2033 = vmatprep.subr.mxu0 0.0
        %2034 = vmatpush1.msra.mxu0 0.0
        %2035 = vmatprep.subr.mxu0 0.0
        %2036 = vmatpush1.msra.mxu0 0.0
        %2037 = vmatprep.subr.mxu0 0.0
        %2038 = vmatpush1.msra.mxu0 0.0
        %2039 = vmatprep.mubr.f32.mxu0 0.0
        %2040 = vmatmul.mubr.f32.gmra.mrb[0].mxu0 %v1602
        %v2041 = vpop.f32.mrb[0].mxu0
        %v2042 = vadd.f32 %v1957, %v2041
        %v2043 = vpop.f32.mrb[0].mxu0
        %2044 = vmatprep.mubr.f32.mxu0 0.0
        %2045 = vmatmul.mubr.f32.gmra.mrb[0].mxu0 %v1603
        %v2046 = vpop.f32.mrb[0].mxu0
        %v2047 = vadd.f32 %v1962, %v2046
        %v2048 = vpop.f32.mrb[0].mxu0
        %2049 = vmatprep.mubr.f32.mxu0 0.0
        %2050 = vmatmul.mubr.f32.gmra.mrb[0].mxu0 %v1604
        %v2051 = vpop.f32.mrb[0].mxu0
        %v2052 = vadd.f32 %v1967, %v2051
        %v2053 = vpop.f32.mrb[0].mxu0
        %2054 = vmatprep.mubr.f32.mxu0 0.0
        %2055 = vmatmul.mubr.f32.gmra.mrb[0].mxu0 %v1605
        %v2056 = vpop.f32.mrb[0].mxu0
        %v2057 = vadd.f32 %v1972, %v2056
        %v2058 = vpop.f32.mrb[0].mxu0
        %2059 = vdwg.mxu0
        %v2060 = vxor.u32 %v2042, 2147483648
        %v2061 = vxor.u32 %v2047, 2147483648
        %v2062 = vxor.u32 %v2052, 2147483648
        %v2063 = vxor.u32 %v2057, 2147483648
        %v2064 = vmul.f32 %v2060, 1.442695
        %v2065 = vpow.pop %v2064
        %v2066 = vmul.f32 %v2061, 1.442695
        %v2067 = vpow.pop %v2066
        %v2068 = vmul.f32 %v2062, 1.442695
        %v2069 = vpow.pop %v2068
        %v2070 = vmul.f32 %v2063, 1.442695
        %v2071 = vpow.pop %v2070
        %v2072 = vadd.f32 %v2065, 1.0
        %v2073 = vadd.f32 %v2067, 1.0
        %v2074 = vadd.f32 %v2069, 1.0
        %v2075 = vadd.f32 %v2071, 1.0
        %v2076 = vrcp.pop %v2072
        %v2077 = vmul.f32 1.0, %v2076
        %v2078 = vrcp.pop %v2073
        %v2079 = vmul.f32 1.0, %v2078
        %v2080 = vrcp.pop %v2074
        %v2081 = vmul.f32 1.0, %v2080
        %v2082 = vrcp.pop %v2075
        %v2083 = vmul.f32 1.0, %v2082
        %v2084 = vmul.f32 %v1815, %v2077
        %v2085 = vmul.f32 %v1820, %v2079
        %v2086 = vmul.f32 %v1825, %v2081
        %v2087 = vmul.f32 %v1830, %v2083
        %v2088 = vadd.f32 %v2084, %v1578
        %v2089 = vadd.f32 %v2085, %v1579
        %v2090 = vadd.f32 %v2086, %v1580
        %v2091 = vadd.f32 %v2087, %v1581
        %v2092 = vmul.f32 %v2088, 0.70710677
        %v2093 = vmul.f32 %v2089, 0.70710677
        %v2094 = vmul.f32 %v2090, 0.70710677
        %v2095 = vmul.f32 %v2091, 0.70710677
        %2096 = vst [vmem:[%s340] sm:$0xff] %v2092
        %2097 = vst [vmem:[%s340 + $0x8] sm:$0xff] %v2093
        %2098 = vst [vmem:[%s340 + $0x10] sm:$0xff] %v2094
        %2099 = vst [vmem:[%s340 + $0x18] sm:$0xff] %v2095
        %s2100 = sand.u32 %s186, 1
        %s2101 = scalar_lea.sflag [#allocation4], %s2100
        %s2102 = sand.u32 %s186, 1
        %s2103 = smul.addr %s2102, 32
        %s2104 = scalar_lea.vmem [#allocation10], %s2103
        // Predicated region
        $region65: #{tpu_custom_call.1} parent=47 // pred_check
          %p2105 = pneg %p196
        $region66: #{tpu_custom_call.1} parent=47 // pred_check_branch
          %2107 = sbr.rel (%p2105) target = $region68
        $region67: #{tpu_custom_call.1} parent=47 // pred_region
          %s2108 = smul.u32 4, %s26
          %s2110 = ssub.s32 512, 512
          %2111 = vsyncadd %s2101, %s2110
          %s2112 = smul.addr %s2108, 128
          %s2113 = scalar_lea.hbm %s7, %s2112
          %s2114 = sshll.u32 %s2104, 4
          %s2115 = int_to_ptr.vmem [resolvable:$true] %s2114
          %2120 = dma.vmem_to_hbm [thread:$0]  %s2115, 512, %s2113, %s2101, 128, 128, 8
        $region68: #{tpu_custom_call.1} parent=47 // pred_fallthru
          _
      $region48: #{tpu_custom_call.1} parent=5 // pred_fallthru
        _
      %p2121 = scmp.le.s32.totalorder 2, %s21
      // Predicated region
      $region69: #{tpu_custom_call.1} parent=5 // pred_check
        %p2122 = pneg %p2121
      $region70: #{tpu_custom_call.1} parent=5 // pred_check_branch
        %2124 = sbr.rel (%p2122) target = $region72
      $region71: #{tpu_custom_call.1} parent=5 // pred_region
        %s2125 = ssub.s32 %s21, 2
        // Predicated region
        $region73: #{tpu_custom_call.1} parent=71 // pred_check
          %p2126 = pneg %p202
        $region74: #{tpu_custom_call.1} parent=71 // pred_check_branch
          %2128 = sbr.rel (%p2126) target = $region76
        $region75: #{tpu_custom_call.1} parent=71 // pred_region
          %s2129 = sand.u32 %s187, 1
          %s2130 = scalar_lea.sflag [#allocation4], %s2129
          %s2131 = sand.u32 %s187, 1
          %s2132 = smul.addr %s2131, 32
          %s2133 = scalar_lea.vmem [#allocation10], %s2132
          %2134 = dma.done %s2130, 512
        $region76: #{tpu_custom_call.1} parent=71 // pred_fallthru
          _
      $region72: #{tpu_custom_call.1} parent=5 // pred_fallthru
        _
    $region6: #{tpu_custom_call.1} parent=1 // loop_footer
      %s25 = sadd.s32 1, %s21
    $region7: #{tpu_custom_call.1} parent=1 // loop_footer_branch
      %20 = sbr.rel target = $region3
    $region8: #{tpu_custom_call.1} parent=1 // loop_exit
      _
    %2135 = vsyncpa [#allocation3], 1
    %s2136 = scalar_lea.sflag [#allocation3], 1
    %2137 = vsyncpa %s2136, 1
    %2138 = vsyncpa [#allocation6], 1
    %2139 = vsyncpa [#allocation9], 1
    %2140 = vsyncpa [#allocation4], 1
    %s2141 = scalar_lea.sflag [#allocation4], 1
    %2142 = vsyncpa %s2141, 1

</llo_original>
